<compile_context>
chip_gen: v7x
topology: tpu7x:2x2x1
jax: 0.10.0
libtpu: 0.0.40
codegen_flags: <defaults>
</compile_context>

<pallas_src>
import functools

import jax
import jax.numpy as jnp
from jax.experimental import pallas as pl
from jax.experimental.pallas import tpu as pltpu


def _round_up(x, m):
    return (x + m - 1) // m * m


def _tanh_dtype():
    """bf16 tanh on chips with a bf16 EUP (v6e / v7x), f32 otherwise (v5e)."""
    try:
        kind = jax.devices()[0].device_kind.lower()
    except Exception:  # pragma: no cover - unusual backends
        return jnp.float32
    if ("v6" in kind) or ("v7" in kind) or ("7x" in kind):
        return jnp.bfloat16
    return jnp.float32


def _recursive_encoder_kernel(
    qw_ref, iw_ref, qp_ref, ip_ref, qq_ref, iq_ref,
    w_hw_ref, b_hw_ref,
    w_hp_x_ref, w_hp_h_ref, b_hp_ref,
    w_hs_x_ref, w_hs_h_ref, b_hs_ref,
    w_out_ref, b_out_ref,
    out_ref,
    *, act_dtype,
):
    f32 = jnp.float32
    bf16 = jnp.bfloat16

    # hw = tanh( (ques_w + img_w) @ W_hw + b_hw )
    xw = (qw_ref[...] + iw_ref[...]).astype(bf16)
    pre_hw = jnp.dot(xw, w_hw_ref[...], preferred_element_type=f32) + b_hw_ref[...]
    hw = jnp.tanh(pre_hw.astype(act_dtype)).astype(bf16)

    # hp = tanh( cat(ques_p + img_p, hw) @ W_hp + b_hp )
    # Implemented as two small-K dots accumulated in f32 (no lane concat).
    xp = (qp_ref[...] + ip_ref[...]).astype(bf16)
    pre_hp = (
        jnp.dot(xp, w_hp_x_ref[...], preferred_element_type=f32)
        + jnp.dot(hw, w_hp_h_ref[...], preferred_element_type=f32)
        + b_hp_ref[...]
    )
    hp = jnp.tanh(pre_hp.astype(act_dtype)).astype(bf16)

    # hs = tanh( cat(ques_q + img_q, hp) @ W_hs + b_hs )
    xq = (qq_ref[...] + iq_ref[...]).astype(bf16)
    pre_hs = (
        jnp.dot(xq, w_hs_x_ref[...], preferred_element_type=f32)
        + jnp.dot(hp, w_hs_h_ref[...], preferred_element_type=f32)
        + b_hs_ref[...]
    )
    hs = jnp.tanh(pre_hs.astype(act_dtype)).astype(bf16)

    # out = hs @ W_out + b_out
    out_ref[...] = (
        jnp.dot(hs, w_out_ref[...], preferred_element_type=f32) + b_out_ref[...]
    ).astype(out_ref.dtype)


@functools.partial(jax.jit, static_argnames=("block_b",))
def recursive_encoder_forward(
    ques_w, img_w, ques_p, img_p, ques_q, img_q, params, *, block_b=512
):
    """params: logical f32 weights, pre-transposed ([D_in, D_out]), biases [1, D_out]."""
    B, input_dim = ques_w.shape
    output_dim = params["w_out"].shape[1]

    bf16 = jnp.bfloat16
    f32 = jnp.float32
    act_dtype = _tanh_dtype()

    # Batch tile: multiple of 8 sublanes, capped at block_b.  Keep >=2 grid
    # steps when possible so v7x's two TensorCores both get batch blocks
    # (near-free extra step on single-TC chips).
    TB = min(_round_up(block_b, 8), _round_up(B, 8))
    if _round_up(B, TB) // TB < 2 and B > 8:
        TB = _round_up(pl.cdiv(B, 2), 8)
    Bp = _round_up(B, TB)

    # Pad only the batch dim (rows) when needed; feature dims stay at natural
    # width (block last-dim equals the full array extent, which is legal).
    def pad_rows(a):
        return a if Bp == B else jnp.pad(a, ((0, Bp - B), (0, 0)))

    acts = [pad_rows(a) for a in (ques_w, img_w, ques_p, img_p, ques_q, img_q)]

    # Weights cast to bf16 (MXU-native); concat-weights split into their x-rows
    # and h-rows so the kernel runs two K-small dots instead of a lane concat.
    w_hw = params["w_hw"].astype(bf16)
    w_hp_x = params["w_hp"][:input_dim].astype(bf16)
    w_hp_h = params["w_hp"][input_dim:].astype(bf16)
    w_hs_x = params["w_hs"][:input_dim].astype(bf16)
    w_hs_h = params["w_hs"][input_dim:].astype(bf16)
    w_out = params["w_out"].astype(bf16)
    b_hw, b_hp, b_hs, b_out = (
        params["b_hw"], params["b_hp"], params["b_hs"], params["b_out"])

    weights = (w_hw, b_hw, w_hp_x, w_hp_h, b_hp, w_hs_x, w_hs_h, b_hs, w_out, b_out)

    act_spec = pl.BlockSpec((TB, input_dim), lambda i: (i, 0))

    def const_spec(a):
        # Full-extent block + constant index -> stays resident in VMEM across
        # grid steps; single-buffered (re-DMA / double-buffer buys nothing).
        return pl.BlockSpec(a.shape, lambda i: (0, 0),
                            pipeline_mode=pl.Buffered(1))

    out_spec = pl.BlockSpec((TB, output_dim), lambda i: (i, 0))

    # VMEM budget derived from actual buffers: double-buffered activation and
    # output tiles + single-buffered resident weights, 2x margin, clamped so it
    # is safe on v7x's 64 MiB VMEM.
    act_bytes = 6 * 2 * TB * input_dim * 4
    out_bytes = 2 * TB * output_dim * 4
    w_bytes = sum(int(w.size) * w.dtype.itemsize for w in weights)
    needed = act_bytes + out_bytes + w_bytes
    vmem_limit = int(min(64 << 20, max(32 << 20, 2 * needed)))

    out = pl.pallas_call(
        functools.partial(_recursive_encoder_kernel, act_dtype=act_dtype),
        out_shape=jax.ShapeDtypeStruct((Bp, output_dim), f32),
        grid=(Bp // TB,),
        in_specs=[act_spec] * 6 + [const_spec(w) for w in weights],
        out_specs=out_spec,
        compiler_params=pltpu.CompilerParams(
            dimension_semantics=("parallel",),   # megacore split on v7x
            vmem_limit_bytes=vmem_limit,
        ),
    )(*acts, *weights)

    return out if Bp == B else out[:B]


def init_params(key, input_dim, embedding_dim, embedding_dim_last, output_dim):
    """Logical (unpadded) f32 parameters, pre-transposed for x @ W."""
    ks = jax.random.split(key, 8)

    def lin(kw, kb, d_in, d_out):
        bound = 1.0 / jnp.sqrt(d_in)
        w = jax.random.uniform(kw, (d_in, d_out), jnp.float32, -bound, bound)
        b = jax.random.uniform(kb, (1, d_out), jnp.float32, -bound, bound)
        return w, b

    w_hw, b_hw = lin(ks[0], ks[1], input_dim, embedding_dim)
    w_hp, b_hp = lin(ks[2], ks[3], input_dim + embedding_dim, embedding_dim)
    w_hs, b_hs = lin(ks[4], ks[5], input_dim + embedding_dim, embedding_dim_last)
    w_out, b_out = lin(ks[6], ks[7], embedding_dim_last, output_dim)

    return {
        "w_hw": w_hw, "b_hw": b_hw,
        "w_hp": w_hp, "b_hp": b_hp,
        "w_hs": w_hs, "b_hs": b_hs,
        "w_out": w_out, "b_out": b_out,
    }


def reference_forward(ques_w, img_w, ques_p, img_p, ques_q, img_q, p):
    hw = jnp.tanh((ques_w + img_w) @ p["w_hw"] + p["b_hw"])
    hp = jnp.tanh(
        jnp.concatenate([ques_p + img_p, hw], axis=1) @ p["w_hp"] + p["b_hp"])
    hs = jnp.tanh(
        jnp.concatenate([ques_q + img_q, hp], axis=1) @ p["w_hs"] + p["b_hs"])
    return hs @ p["w_out"] + p["b_out"]


if __name__ == "__main__":
    B = 256                  # split into two 128-row tiles -> exercises the grid
    input_dim = 32
    embedding_dim = 32
    embedding_dim_last = 32
    output_dim = 16

    key = jax.random.PRNGKey(0)
    k_in, k_par = jax.random.split(key)
    ks = jax.random.split(k_in, 6)

    ques_w = jax.random.normal(ks[0], (B, input_dim), jnp.float32)
    img_w = jax.random.normal(ks[1], (B, input_dim), jnp.float32)
    ques_p = jax.random.normal(ks[2], (B, input_dim), jnp.float32)
    img_p = jax.random.normal(ks[3], (B, input_dim), jnp.float32)
    ques_q = jax.random.normal(ks[4], (B, input_dim), jnp.float32)
    img_q = jax.random.normal(ks[5], (B, input_dim), jnp.float32)

    params = init_params(
        k_par, input_dim, embedding_dim, embedding_dim_last, output_dim)

    out = recursive_encoder_forward(
        ques_w, img_w, ques_p, img_p, ques_q, img_q, params, block_b=512)
    out = jax.block_until_ready(out)

    ref = reference_forward(ques_w, img_w, ques_p, img_p, ques_q, img_q, params)
    assert out.shape == (B, output_dim)
    # bf16 MXU inputs (and bf16 tanh on v6e/v7x) -> loosened tolerance vs f32.
    assert jnp.allclose(out, ref, atol=6e-2, rtol=6e-2), (
        float(jnp.max(jnp.abs(out - ref))))

    print("KERNEL_OK")
</pallas_src>

<mosaic_0001>
module attributes {stable_mosaic.version = 11 : i64} {
  func.func @_recursive_encoder_kernel(%arg0: i32, %arg1: memref<128x32xf32, #tpu.memory_space<vmem>>, %arg2: memref<128x32xf32, #tpu.memory_space<vmem>>, %arg3: memref<128x32xf32, #tpu.memory_space<vmem>>, %arg4: memref<128x32xf32, #tpu.memory_space<vmem>>, %arg5: memref<128x32xf32, #tpu.memory_space<vmem>>, %arg6: memref<128x32xf32, #tpu.memory_space<vmem>>, %arg7: memref<32x32xbf16, #tpu.memory_space<vmem>>, %arg8: memref<1x32xf32, #tpu.memory_space<vmem>>, %arg9: memref<32x32xbf16, #tpu.memory_space<vmem>>, %arg10: memref<32x32xbf16, #tpu.memory_space<vmem>>, %arg11: memref<1x32xf32, #tpu.memory_space<vmem>>, %arg12: memref<32x32xbf16, #tpu.memory_space<vmem>>, %arg13: memref<32x32xbf16, #tpu.memory_space<vmem>>, %arg14: memref<1x32xf32, #tpu.memory_space<vmem>>, %arg15: memref<32x16xbf16, #tpu.memory_space<vmem>>, %arg16: memref<1x16xf32, #tpu.memory_space<vmem>>, %arg17: memref<128x16xf32, #tpu.memory_space<vmem>>) attributes {dimension_semantics = [#tpu.dimension_semantics<parallel>], iteration_bounds = array<i64: 2>, scalar_prefetch = 0 : i64, scratch_operands = 0 : i64, tpu.core_type = #tpu.core_type<tc>, window_params = [{transform_indices = @transform_0, window_bounds = array<i64: 128, 32>}, {transform_indices = @transform_1, window_bounds = array<i64: 128, 32>}, {transform_indices = @transform_2, window_bounds = array<i64: 128, 32>}, {transform_indices = @transform_3, window_bounds = array<i64: 128, 32>}, {transform_indices = @transform_4, window_bounds = array<i64: 128, 32>}, {transform_indices = @transform_5, window_bounds = array<i64: 128, 32>}, {pipeline_mode = #tpu.pipeline_mode<synchronous>, transform_indices = @transform_6, window_bounds = array<i64: 32, 32>}, {pipeline_mode = #tpu.pipeline_mode<synchronous>, transform_indices = @transform_7, window_bounds = array<i64: 1, 32>}, {pipeline_mode = #tpu.pipeline_mode<synchronous>, transform_indices = @transform_8, window_bounds = array<i64: 32, 32>}, {pipeline_mode = #tpu.pipeline_mode<synchronous>, transform_indices = @transform_9, window_bounds = array<i64: 32, 32>}, {pipeline_mode = #tpu.pipeline_mode<synchronous>, transform_indices = @transform_10, window_bounds = array<i64: 1, 32>}, {pipeline_mode = #tpu.pipeline_mode<synchronous>, transform_indices = @transform_11, window_bounds = array<i64: 32, 32>}, {pipeline_mode = #tpu.pipeline_mode<synchronous>, transform_indices = @transform_12, window_bounds = array<i64: 32, 32>}, {pipeline_mode = #tpu.pipeline_mode<synchronous>, transform_indices = @transform_13, window_bounds = array<i64: 1, 32>}, {pipeline_mode = #tpu.pipeline_mode<synchronous>, transform_indices = @transform_14, window_bounds = array<i64: 32, 16>}, {pipeline_mode = #tpu.pipeline_mode<synchronous>, transform_indices = @transform_15, window_bounds = array<i64: 1, 16>}, {transform_indices = @transform_16, window_bounds = array<i64: 128, 16>}]} {
    %c0 = arith.constant 0 : index
    %c0_0 = arith.constant 0 : index
    %0 = vector.load %arg1[%c0, %c0_0] : memref<128x32xf32, #tpu.memory_space<vmem>>, vector<128x32xf32>
    %c0_1 = arith.constant 0 : index
    %c0_2 = arith.constant 0 : index
    %1 = vector.load %arg2[%c0_1, %c0_2] : memref<128x32xf32, #tpu.memory_space<vmem>>, vector<128x32xf32>
    %2 = arith.addf %0, %1 : vector<128x32xf32>
    %3 = arith.truncf %2 : vector<128x32xf32> to vector<128x32xbf16>
    %c0_3 = arith.constant 0 : index
    %c0_4 = arith.constant 0 : index
    %4 = vector.load %arg7[%c0_3, %c0_4] : memref<32x32xbf16, #tpu.memory_space<vmem>>, vector<32x32xbf16>
    %cst = arith.constant dense<0.000000e+00> : vector<128x32xf32>
    %5 = tpu.matmul %3, %4, %cst {dimension_numbers = #tpu.dot_dimension_numbers<[1], [0], [0], [1], [0, 0, 1, 1], [], []>} : vector<128x32xbf16>, vector<32x32xbf16>, vector<128x32xf32> -> vector<128x32xf32>
    %c0_5 = arith.constant 0 : index
    %c0_6 = arith.constant 0 : index
    %6 = vector.load %arg8[%c0_5, %c0_6] : memref<1x32xf32, #tpu.memory_space<vmem>>, vector<1x32xf32>
    %7 = vector.broadcast %6 : vector<1x32xf32> to vector<128x32xf32>
    %8 = arith.addf %5, %7 : vector<128x32xf32>
    %9 = math.tanh %8 : vector<128x32xf32>
    %10 = arith.truncf %9 : vector<128x32xf32> to vector<128x32xbf16>
    %c0_7 = arith.constant 0 : index
    %c0_8 = arith.constant 0 : index
    %11 = vector.load %arg3[%c0_7, %c0_8] : memref<128x32xf32, #tpu.memory_space<vmem>>, vector<128x32xf32>
    %c0_9 = arith.constant 0 : index
    %c0_10 = arith.constant 0 : index
    %12 = vector.load %arg4[%c0_9, %c0_10] : memref<128x32xf32, #tpu.memory_space<vmem>>, vector<128x32xf32>
    %13 = arith.addf %11, %12 : vector<128x32xf32>
    %14 = arith.truncf %13 : vector<128x32xf32> to vector<128x32xbf16>
    %c0_11 = arith.constant 0 : index
    %c0_12 = arith.constant 0 : index
    %15 = vector.load %arg9[%c0_11, %c0_12] : memref<32x32xbf16, #tpu.memory_space<vmem>>, vector<32x32xbf16>
    %cst_13 = arith.constant dense<0.000000e+00> : vector<128x32xf32>
    %16 = tpu.matmul %14, %15, %cst_13 {dimension_numbers = #tpu.dot_dimension_numbers<[1], [0], [0], [1], [0, 0, 1, 1], [], []>} : vector<128x32xbf16>, vector<32x32xbf16>, vector<128x32xf32> -> vector<128x32xf32>
    %c0_14 = arith.constant 0 : index
    %c0_15 = arith.constant 0 : index
    %17 = vector.load %arg10[%c0_14, %c0_15] : memref<32x32xbf16, #tpu.memory_space<vmem>>, vector<32x32xbf16>
    %cst_16 = arith.constant dense<0.000000e+00> : vector<128x32xf32>
    %18 = tpu.matmul %10, %17, %cst_16 {dimension_numbers = #tpu.dot_dimension_numbers<[1], [0], [0], [1], [0, 0, 1, 1], [], []>} : vector<128x32xbf16>, vector<32x32xbf16>, vector<128x32xf32> -> vector<128x32xf32>
    %19 = arith.addf %16, %18 : vector<128x32xf32>
    %c0_17 = arith.constant 0 : index
    %c0_18 = arith.constant 0 : index
    %20 = vector.load %arg11[%c0_17, %c0_18] : memref<1x32xf32, #tpu.memory_space<vmem>>, vector<1x32xf32>
    %21 = vector.broadcast %20 : vector<1x32xf32> to vector<128x32xf32>
    %22 = arith.addf %19, %21 : vector<128x32xf32>
    %23 = math.tanh %22 : vector<128x32xf32>
    %24 = arith.truncf %23 : vector<128x32xf32> to vector<128x32xbf16>
    %c0_19 = arith.constant 0 : index
    %c0_20 = arith.constant 0 : index
    %25 = vector.load %arg5[%c0_19, %c0_20] : memref<128x32xf32, #tpu.memory_space<vmem>>, vector<128x32xf32>
    %c0_21 = arith.constant 0 : index
    %c0_22 = arith.constant 0 : index
    %26 = vector.load %arg6[%c0_21, %c0_22] : memref<128x32xf32, #tpu.memory_space<vmem>>, vector<128x32xf32>
    %27 = arith.addf %25, %26 : vector<128x32xf32>
    %28 = arith.truncf %27 : vector<128x32xf32> to vector<128x32xbf16>
    %c0_23 = arith.constant 0 : index
    %c0_24 = arith.constant 0 : index
    %29 = vector.load %arg12[%c0_23, %c0_24] : memref<32x32xbf16, #tpu.memory_space<vmem>>, vector<32x32xbf16>
    %cst_25 = arith.constant dense<0.000000e+00> : vector<128x32xf32>
    %30 = tpu.matmul %28, %29, %cst_25 {dimension_numbers = #tpu.dot_dimension_numbers<[1], [0], [0], [1], [0, 0, 1, 1], [], []>} : vector<128x32xbf16>, vector<32x32xbf16>, vector<128x32xf32> -> vector<128x32xf32>
    %c0_26 = arith.constant 0 : index
    %c0_27 = arith.constant 0 : index
    %31 = vector.load %arg13[%c0_26, %c0_27] : memref<32x32xbf16, #tpu.memory_space<vmem>>, vector<32x32xbf16>
    %cst_28 = arith.constant dense<0.000000e+00> : vector<128x32xf32>
    %32 = tpu.matmul %24, %31, %cst_28 {dimension_numbers = #tpu.dot_dimension_numbers<[1], [0], [0], [1], [0, 0, 1, 1], [], []>} : vector<128x32xbf16>, vector<32x32xbf16>, vector<128x32xf32> -> vector<128x32xf32>
    %33 = arith.addf %30, %32 : vector<128x32xf32>
    %c0_29 = arith.constant 0 : index
    %c0_30 = arith.constant 0 : index
    %34 = vector.load %arg14[%c0_29, %c0_30] : memref<1x32xf32, #tpu.memory_space<vmem>>, vector<1x32xf32>
    %35 = vector.broadcast %34 : vector<1x32xf32> to vector<128x32xf32>
    %36 = arith.addf %33, %35 : vector<128x32xf32>
    %37 = math.tanh %36 : vector<128x32xf32>
    %38 = arith.truncf %37 : vector<128x32xf32> to vector<128x32xbf16>
    %c0_31 = arith.constant 0 : index
    %c0_32 = arith.constant 0 : index
    %39 = vector.load %arg15[%c0_31, %c0_32] : memref<32x16xbf16, #tpu.memory_space<vmem>>, vector<32x16xbf16>
    %cst_33 = arith.constant dense<0.000000e+00> : vector<128x16xf32>
    %40 = tpu.matmul %38, %39, %cst_33 {dimension_numbers = #tpu.dot_dimension_numbers<[1], [0], [0], [1], [0, 0, 1, 1], [], []>} : vector<128x32xbf16>, vector<32x16xbf16>, vector<128x16xf32> -> vector<128x16xf32>
    %c0_34 = arith.constant 0 : index
    %c0_35 = arith.constant 0 : index
    %41 = vector.load %arg16[%c0_34, %c0_35] : memref<1x16xf32, #tpu.memory_space<vmem>>, vector<1x16xf32>
    %42 = vector.broadcast %41 : vector<1x16xf32> to vector<128x16xf32>
    %43 = arith.addf %40, %42 : vector<128x16xf32>
    %c0_36 = arith.constant 0 : index
    %c0_37 = arith.constant 0 : index
    %44 = vector.load %arg17[%c0_36, %c0_37] : memref<128x16xf32, #tpu.memory_space<vmem>>, vector<128x16xf32>
    tpu.vector_store %arg17[%c0_36, %c0_37], %43 {strides = array<i32>} : memref<128x16xf32, #tpu.memory_space<vmem>>, vector<128x16xf32>,
    return
  }
  func.func @transform_0(%arg0: i32) -> (i32, i32) {
    %c0_i32 = arith.constant 0 : i32
    %c0_i32_0 = arith.constant 0 : i32
    return %arg0, %c0_i32 : i32, i32
  }
  func.func @transform_1(%arg0: i32) -> (i32, i32) {
    %c0_i32 = arith.constant 0 : i32
    %c0_i32_0 = arith.constant 0 : i32
    return %arg0, %c0_i32 : i32, i32
  }
  func.func @transform_2(%arg0: i32) -> (i32, i32) {
    %c0_i32 = arith.constant 0 : i32
    %c0_i32_0 = arith.constant 0 : i32
    return %arg0, %c0_i32 : i32, i32
  }
  func.func @transform_3(%arg0: i32) -> (i32, i32) {
    %c0_i32 = arith.constant 0 : i32
    %c0_i32_0 = arith.constant 0 : i32
    return %arg0, %c0_i32 : i32, i32
  }
  func.func @transform_4(%arg0: i32) -> (i32, i32) {
    %c0_i32 = arith.constant 0 : i32
    %c0_i32_0 = arith.constant 0 : i32
    return %arg0, %c0_i32 : i32, i32
  }
  func.func @transform_5(%arg0: i32) -> (i32, i32) {
    %c0_i32 = arith.constant 0 : i32
    %c0_i32_0 = arith.constant 0 : i32
    return %arg0, %c0_i32 : i32, i32
  }
  func.func @transform_6(%arg0: i32) -> (i32, i32) {
    %c0_i32 = arith.constant 0 : i32
    %c0_i32_0 = arith.constant 0 : i32
    %c0_i32_1 = arith.constant 0 : i32
    return %c0_i32, %c0_i32_0 : i32, i32
  }
  func.func @transform_7(%arg0: i32) -> (i32, i32) {
    %c0_i32 = arith.constant 0 : i32
    %c0_i32_0 = arith.constant 0 : i32
    %c0_i32_1 = arith.constant 0 : i32
    return %c0_i32, %c0_i32_0 : i32, i32
  }
  func.func @transform_8(%arg0: i32) -> (i32, i32) {
    %c0_i32 = arith.constant 0 : i32
    %c0_i32_0 = arith.constant 0 : i32
    %c0_i32_1 = arith.constant 0 : i32
    return %c0_i32, %c0_i32_0 : i32, i32
  }
  func.func @transform_9(%arg0: i32) -> (i32, i32) {
    %c0_i32 = arith.constant 0 : i32
    %c0_i32_0 = arith.constant 0 : i32
    %c0_i32_1 = arith.constant 0 : i32
    return %c0_i32, %c0_i32_0 : i32, i32
  }
  func.func @transform_10(%arg0: i32) -> (i32, i32) {
    %c0_i32 = arith.constant 0 : i32
    %c0_i32_0 = arith.constant 0 : i32
    %c0_i32_1 = arith.constant 0 : i32
    return %c0_i32, %c0_i32_0 : i32, i32
  }
  func.func @transform_11(%arg0: i32) -> (i32, i32) {
    %c0_i32 = arith.constant 0 : i32
    %c0_i32_0 = arith.constant 0 : i32
    %c0_i32_1 = arith.constant 0 : i32
    return %c0_i32, %c0_i32_0 : i32, i32
  }
  func.func @transform_12(%arg0: i32) -> (i32, i32) {
    %c0_i32 = arith.constant 0 : i32
    %c0_i32_0 = arith.constant 0 : i32
    %c0_i32_1 = arith.constant 0 : i32
    return %c0_i32, %c0_i32_0 : i32, i32
  }
  func.func @transform_13(%arg0: i32) -> (i32, i32) {
    %c0_i32 = arith.constant 0 : i32
    %c0_i32_0 = arith.constant 0 : i32
    %c0_i32_1 = arith.constant 0 : i32
    return %c0_i32, %c0_i32_0 : i32, i32
  }
  func.func @transform_14(%arg0: i32) -> (i32, i32) {
    %c0_i32 = arith.constant 0 : i32
    %c0_i32_0 = arith.constant 0 : i32
    %c0_i32_1 = arith.constant 0 : i32
    return %c0_i32, %c0_i32_0 : i32, i32
  }
  func.func @transform_15(%arg0: i32) -> (i32, i32) {
    %c0_i32 = arith.constant 0 : i32
    %c0_i32_0 = arith.constant 0 : i32
    %c0_i32_1 = arith.constant 0 : i32
    return %c0_i32, %c0_i32_0 : i32, i32
  }
  func.func @transform_16(%arg0: i32) -> (i32, i32) {
    %c0_i32 = arith.constant 0 : i32
    %c0_i32_0 = arith.constant 0 : i32
    return %arg0, %c0_i32 : i32, i32
  }
}

</mosaic_0001>

<llo_original>
// kernel: recursive_encoder_forward.1
$region0: #{recursive_encoder_forward.1}
  #allocation0 [shape = 'u32[]', space=smem, size = 0x4, offset = 0x4, fixed_abs, tag = 'smem constant byte address 0x4 - core index']
  #allocation1 [shape = 'u32[144,128]{1,0:T(1,128)}', space=vmem, size = 0x12000, scoped, tag = 'internal scratch']
  %s0 = inlined_call_operand.vmem [shape: f32[256,32], index: 0, kind: input, shape index: {}]
  %s1 = inlined_call_operand.vmem [shape: f32[256,32], index: 1, kind: input, shape index: {}]
  %s2 = inlined_call_operand.vmem [shape: f32[256,32], index: 2, kind: input, shape index: {}]
  %s3 = inlined_call_operand.vmem [shape: f32[256,32], index: 3, kind: input, shape index: {}]
  %s4 = inlined_call_operand.vmem [shape: f32[256,32], index: 4, kind: input, shape index: {}]
  %s5 = inlined_call_operand.vmem [shape: f32[256,32], index: 5, kind: input, shape index: {}]
  %s6 = inlined_call_operand.vmem [shape: bf16[32,32], index: 6, kind: input, shape index: {}]
  %s7 = inlined_call_operand.vmem [shape: f32[1,32], index: 7, kind: input, shape index: {}]
  %s8 = inlined_call_operand.vmem [shape: bf16[32,32], index: 8, kind: input, shape index: {}]
  %s9 = inlined_call_operand.vmem [shape: bf16[32,32], index: 9, kind: input, shape index: {}]
  %s10 = inlined_call_operand.vmem [shape: f32[1,32], index: 10, kind: input, shape index: {}]
  %s11 = inlined_call_operand.vmem [shape: bf16[32,32], index: 11, kind: input, shape index: {}]
  %s12 = inlined_call_operand.vmem [shape: bf16[32,32], index: 12, kind: input, shape index: {}]
  %s13 = inlined_call_operand.vmem [shape: f32[1,32], index: 13, kind: input, shape index: {}]
  %s14 = inlined_call_operand.vmem [shape: bf16[32,16], index: 14, kind: input, shape index: {}]
  %s15 = inlined_call_operand.vmem [shape: f32[1,16], index: 15, kind: input, shape index: {}]
  %s16 = inlined_call_operand.vmem [shape: f32[256,16], index: 16, kind: output, shape index: {}]
  %s17 = sld [smem:[#allocation0]]
  $region97: #{recursive_encoder_forward.1} parent=0
    _
  %s19 = ssub.s32 1, %s17
  %s20 = scalar_select 0, %s19, %s17
  loop: start=0, step=1, limit=4
  $region2: #{recursive_encoder_forward.1} parent=0 // loop_pre_header
    _
  $region3: #{recursive_encoder_forward.1} parent=0 // loop_header
    %s22 = sphi 0, %s26
    %p23 = scmp.ge.s32.totalorder %s22, 4
    %s32 = sphi 0, %s34
    %s35 = sphi 0, %s32
    %s36 = sphi 0, %s35
    %s52 = sphi 0, %s36
    %s58 = sphi 0, %s60
    %s61 = sphi 0, %s58
    %s62 = sphi 0, %s61
    %s78 = sphi 0, %s62
    %s84 = sphi 0, %s86
    %s87 = sphi 0, %s84
    %s88 = sphi 0, %s87
    %s104 = sphi 0, %s88
    %s110 = sphi 0, %s112
    %s113 = sphi 0, %s110
    %s114 = sphi 0, %s113
    %s130 = sphi 0, %s114
    %s136 = sphi 0, %s138
    %s139 = sphi 0, %s136
    %s140 = sphi 0, %s139
    %s156 = sphi 0, %s140
    %s162 = sphi 0, %s164
    %s165 = sphi 0, %s162
    %s166 = sphi 0, %s165
    %s182 = sphi 0, %s166
    %s186 = sphi 0, %s186
    %s188 = sphi 0, %s186
    %s189 = sphi 0, %s188
    %s203 = sphi 0, %s189
    %s207 = sphi 0, %s207
    %s209 = sphi 0, %s207
    %s210 = sphi 0, %s209
    %s224 = sphi 0, %s210
    %s228 = sphi 0, %s228
    %s230 = sphi 0, %s228
    %s231 = sphi 0, %s230
    %s245 = sphi 0, %s231
    %s249 = sphi 0, %s249
    %s251 = sphi 0, %s249
    %s252 = sphi 0, %s251
    %s266 = sphi 0, %s252
    %s270 = sphi 0, %s270
    %s272 = sphi 0, %s270
    %s273 = sphi 0, %s272
    %s287 = sphi 0, %s273
    %s291 = sphi 0, %s291
    %s293 = sphi 0, %s291
    %s294 = sphi 0, %s293
    %s308 = sphi 0, %s294
    %s312 = sphi 0, %s312
    %s314 = sphi 0, %s312
    %s315 = sphi 0, %s314
    %s329 = sphi 0, %s315
    %s333 = sphi 0, %s333
    %s335 = sphi 0, %s333
    %s336 = sphi 0, %s335
    %s350 = sphi 0, %s336
    %s354 = sphi 0, %s354
    %s356 = sphi 0, %s354
    %s357 = sphi 0, %s356
    %s371 = sphi 0, %s357
    %s375 = sphi 0, %s375
    %s377 = sphi 0, %s375
    %s378 = sphi 0, %s377
    %s392 = sphi 0, %s378
    %s398 = sphi 0, %s400
    %s401 = sphi 0, %s398
    %s402 = sphi 0, %s401
    %s418 = sphi 0, %s402
  $region4: #{recursive_encoder_forward.1} parent=0 // loop_header_branch
    %25 = sbr.rel (%p23) target = $region8
  $region5: #{recursive_encoder_forward.1} parent=0 // loop_body
    %s27 = ssub.s32 %s22, 1
    %s28 = ssub.s32 %s22, 2
    %s29 = sadd.s32 %s22, 1
    %s30 = ssub.s32 %s22, %s29
    %p31 = scmp.eq.s32.totalorder %s30, 0
    %s33 = sadd.s32 %s32, 1
    %s34 = scalar_select %p31, %s32, %s33
    %p37 = pneg %p31
    %p38 = scmp.eq.s32.totalorder %s22, 1
    %p39 = por %p37, %p38
    %p40 = scmp.ne.s32.totalorder %s32, %s35
    %p41 = scmp.eq.s32.totalorder %s22, 0
    %p42 = por %p40, %p41
    %p43 = scmp.ne.s32.totalorder %s32, %s35
    %p44 = scmp.eq.s32.totalorder %s27, 1
    %p45 = por %p43, %p44
    %p46 = scmp.ne.s32.totalorder %s35, %s36
    %p47 = scmp.eq.s32.totalorder %s27, 0
    %p48 = por %p46, %p47
    %p49 = scmp.ne.s32.totalorder %s35, %s36
    %p50 = scmp.eq.s32.totalorder %s28, 1
    %p51 = por %p49, %p50
    %p53 = scmp.ne.s32.totalorder %s36, %s52
    %p54 = scmp.eq.s32.totalorder %s28, 0
    %p55 = por %p53, %p54
    %s56 = ssub.s32 %s22, %s29
    %p57 = scmp.eq.s32.totalorder %s56, 0
    %s59 = sadd.s32 %s58, 1
    %s60 = scalar_select %p57, %s58, %s59
    %p63 = pneg %p57
    %p64 = scmp.eq.s32.totalorder %s22, 1
    %p65 = por %p63, %p64
    %p66 = scmp.ne.s32.totalorder %s58, %s61
    %p67 = scmp.eq.s32.totalorder %s22, 0
    %p68 = por %p66, %p67
    %p69 = scmp.ne.s32.totalorder %s58, %s61
    %p70 = scmp.eq.s32.totalorder %s27, 1
    %p71 = por %p69, %p70
    %p72 = scmp.ne.s32.totalorder %s61, %s62
    %p73 = scmp.eq.s32.totalorder %s27, 0
    %p74 = por %p72, %p73
    %p75 = scmp.ne.s32.totalorder %s61, %s62
    %p76 = scmp.eq.s32.totalorder %s28, 1
    %p77 = por %p75, %p76
    %p79 = scmp.ne.s32.totalorder %s62, %s78
    %p80 = scmp.eq.s32.totalorder %s28, 0
    %p81 = por %p79, %p80
    %s82 = ssub.s32 %s22, %s29
    %p83 = scmp.eq.s32.totalorder %s82, 0
    %s85 = sadd.s32 %s84, 1
    %s86 = scalar_select %p83, %s84, %s85
    %p89 = pneg %p83
    %p90 = scmp.eq.s32.totalorder %s22, 1
    %p91 = por %p89, %p90
    %p92 = scmp.ne.s32.totalorder %s84, %s87
    %p93 = scmp.eq.s32.totalorder %s22, 0
    %p94 = por %p92, %p93
    %p95 = scmp.ne.s32.totalorder %s84, %s87
    %p96 = scmp.eq.s32.totalorder %s27, 1
    %p97 = por %p95, %p96
    %p98 = scmp.ne.s32.totalorder %s87, %s88
    %p99 = scmp.eq.s32.totalorder %s27, 0
    %p100 = por %p98, %p99
    %p101 = scmp.ne.s32.totalorder %s87, %s88
    %p102 = scmp.eq.s32.totalorder %s28, 1
    %p103 = por %p101, %p102
    %p105 = scmp.ne.s32.totalorder %s88, %s104
    %p106 = scmp.eq.s32.totalorder %s28, 0
    %p107 = por %p105, %p106
    %s108 = ssub.s32 %s22, %s29
    %p109 = scmp.eq.s32.totalorder %s108, 0
    %s111 = sadd.s32 %s110, 1
    %s112 = scalar_select %p109, %s110, %s111
    %p115 = pneg %p109
    %p116 = scmp.eq.s32.totalorder %s22, 1
    %p117 = por %p115, %p116
    %p118 = scmp.ne.s32.totalorder %s110, %s113
    %p119 = scmp.eq.s32.totalorder %s22, 0
    %p120 = por %p118, %p119
    %p121 = scmp.ne.s32.totalorder %s110, %s113
    %p122 = scmp.eq.s32.totalorder %s27, 1
    %p123 = por %p121, %p122
    %p124 = scmp.ne.s32.totalorder %s113, %s114
    %p125 = scmp.eq.s32.totalorder %s27, 0
    %p126 = por %p124, %p125
    %p127 = scmp.ne.s32.totalorder %s113, %s114
    %p128 = scmp.eq.s32.totalorder %s28, 1
    %p129 = por %p127, %p128
    %p131 = scmp.ne.s32.totalorder %s114, %s130
    %p132 = scmp.eq.s32.totalorder %s28, 0
    %p133 = por %p131, %p132
    %s134 = ssub.s32 %s22, %s29
    %p135 = scmp.eq.s32.totalorder %s134, 0
    %s137 = sadd.s32 %s136, 1
    %s138 = scalar_select %p135, %s136, %s137
    %p141 = pneg %p135
    %p142 = scmp.eq.s32.totalorder %s22, 1
    %p143 = por %p141, %p142
    %p144 = scmp.ne.s32.totalorder %s136, %s139
    %p145 = scmp.eq.s32.totalorder %s22, 0
    %p146 = por %p144, %p145
    %p147 = scmp.ne.s32.totalorder %s136, %s139
    %p148 = scmp.eq.s32.totalorder %s27, 1
    %p149 = por %p147, %p148
    %p150 = scmp.ne.s32.totalorder %s139, %s140
    %p151 = scmp.eq.s32.totalorder %s27, 0
    %p152 = por %p150, %p151
    %p153 = scmp.ne.s32.totalorder %s139, %s140
    %p154 = scmp.eq.s32.totalorder %s28, 1
    %p155 = por %p153, %p154
    %p157 = scmp.ne.s32.totalorder %s140, %s156
    %p158 = scmp.eq.s32.totalorder %s28, 0
    %p159 = por %p157, %p158
    %s160 = ssub.s32 %s22, %s29
    %p161 = scmp.eq.s32.totalorder %s160, 0
    %s163 = sadd.s32 %s162, 1
    %s164 = scalar_select %p161, %s162, %s163
    %p167 = pneg %p161
    %p168 = scmp.eq.s32.totalorder %s22, 1
    %p169 = por %p167, %p168
    %p170 = scmp.ne.s32.totalorder %s162, %s165
    %p171 = scmp.eq.s32.totalorder %s22, 0
    %p172 = por %p170, %p171
    %p173 = scmp.ne.s32.totalorder %s162, %s165
    %p174 = scmp.eq.s32.totalorder %s27, 1
    %p175 = por %p173, %p174
    %p176 = scmp.ne.s32.totalorder %s165, %s166
    %p177 = scmp.eq.s32.totalorder %s27, 0
    %p178 = por %p176, %p177
    %p179 = scmp.ne.s32.totalorder %s165, %s166
    %p180 = scmp.eq.s32.totalorder %s28, 1
    %p181 = por %p179, %p180
    %p183 = scmp.ne.s32.totalorder %s166, %s182
    %p184 = scmp.eq.s32.totalorder %s28, 0
    %p185 = por %p183, %p184
    %s187 = sadd.s32 %s186, 1
    %p190 = scmp.eq.s32.totalorder %s22, 1
    %p191 = scmp.ne.s32.totalorder %s186, %s188
    %p192 = scmp.eq.s32.totalorder %s22, 0
    %p193 = por %p191, %p192
    %p194 = scmp.ne.s32.totalorder %s186, %s188
    %p195 = scmp.eq.s32.totalorder %s27, 1
    %p196 = por %p194, %p195
    %p197 = scmp.ne.s32.totalorder %s188, %s189
    %p198 = scmp.eq.s32.totalorder %s27, 0
    %p199 = por %p197, %p198
    %p200 = scmp.ne.s32.totalorder %s188, %s189
    %p201 = scmp.eq.s32.totalorder %s28, 1
    %p202 = por %p200, %p201
    %p204 = scmp.ne.s32.totalorder %s189, %s203
    %p205 = scmp.eq.s32.totalorder %s28, 0
    %p206 = por %p204, %p205
    %s208 = sadd.s32 %s207, 1
    %p211 = scmp.eq.s32.totalorder %s22, 1
    %p212 = scmp.ne.s32.totalorder %s207, %s209
    %p213 = scmp.eq.s32.totalorder %s22, 0
    %p214 = por %p212, %p213
    %p215 = scmp.ne.s32.totalorder %s207, %s209
    %p216 = scmp.eq.s32.totalorder %s27, 1
    %p217 = por %p215, %p216
    %p218 = scmp.ne.s32.totalorder %s209, %s210
    %p219 = scmp.eq.s32.totalorder %s27, 0
    %p220 = por %p218, %p219
    %p221 = scmp.ne.s32.totalorder %s209, %s210
    %p222 = scmp.eq.s32.totalorder %s28, 1
    %p223 = por %p221, %p222
    %p225 = scmp.ne.s32.totalorder %s210, %s224
    %p226 = scmp.eq.s32.totalorder %s28, 0
    %p227 = por %p225, %p226
    %s229 = sadd.s32 %s228, 1
    %p232 = scmp.eq.s32.totalorder %s22, 1
    %p233 = scmp.ne.s32.totalorder %s228, %s230
    %p234 = scmp.eq.s32.totalorder %s22, 0
    %p235 = por %p233, %p234
    %p236 = scmp.ne.s32.totalorder %s228, %s230
    %p237 = scmp.eq.s32.totalorder %s27, 1
    %p238 = por %p236, %p237
    %p239 = scmp.ne.s32.totalorder %s230, %s231
    %p240 = scmp.eq.s32.totalorder %s27, 0
    %p241 = por %p239, %p240
    %p242 = scmp.ne.s32.totalorder %s230, %s231
    %p243 = scmp.eq.s32.totalorder %s28, 1
    %p244 = por %p242, %p243
    %p246 = scmp.ne.s32.totalorder %s231, %s245
    %p247 = scmp.eq.s32.totalorder %s28, 0
    %p248 = por %p246, %p247
    %s250 = sadd.s32 %s249, 1
    %p253 = scmp.eq.s32.totalorder %s22, 1
    %p254 = scmp.ne.s32.totalorder %s249, %s251
    %p255 = scmp.eq.s32.totalorder %s22, 0
    %p256 = por %p254, %p255
    %p257 = scmp.ne.s32.totalorder %s249, %s251
    %p258 = scmp.eq.s32.totalorder %s27, 1
    %p259 = por %p257, %p258
    %p260 = scmp.ne.s32.totalorder %s251, %s252
    %p261 = scmp.eq.s32.totalorder %s27, 0
    %p262 = por %p260, %p261
    %p263 = scmp.ne.s32.totalorder %s251, %s252
    %p264 = scmp.eq.s32.totalorder %s28, 1
    %p265 = por %p263, %p264
    %p267 = scmp.ne.s32.totalorder %s252, %s266
    %p268 = scmp.eq.s32.totalorder %s28, 0
    %p269 = por %p267, %p268
    %s271 = sadd.s32 %s270, 1
    %p274 = scmp.eq.s32.totalorder %s22, 1
    %p275 = scmp.ne.s32.totalorder %s270, %s272
    %p276 = scmp.eq.s32.totalorder %s22, 0
    %p277 = por %p275, %p276
    %p278 = scmp.ne.s32.totalorder %s270, %s272
    %p279 = scmp.eq.s32.totalorder %s27, 1
    %p280 = por %p278, %p279
    %p281 = scmp.ne.s32.totalorder %s272, %s273
    %p282 = scmp.eq.s32.totalorder %s27, 0
    %p283 = por %p281, %p282
    %p284 = scmp.ne.s32.totalorder %s272, %s273
    %p285 = scmp.eq.s32.totalorder %s28, 1
    %p286 = por %p284, %p285
    %p288 = scmp.ne.s32.totalorder %s273, %s287
    %p289 = scmp.eq.s32.totalorder %s28, 0
    %p290 = por %p288, %p289
    %s292 = sadd.s32 %s291, 1
    %p295 = scmp.eq.s32.totalorder %s22, 1
    %p296 = scmp.ne.s32.totalorder %s291, %s293
    %p297 = scmp.eq.s32.totalorder %s22, 0
    %p298 = por %p296, %p297
    %p299 = scmp.ne.s32.totalorder %s291, %s293
    %p300 = scmp.eq.s32.totalorder %s27, 1
    %p301 = por %p299, %p300
    %p302 = scmp.ne.s32.totalorder %s293, %s294
    %p303 = scmp.eq.s32.totalorder %s27, 0
    %p304 = por %p302, %p303
    %p305 = scmp.ne.s32.totalorder %s293, %s294
    %p306 = scmp.eq.s32.totalorder %s28, 1
    %p307 = por %p305, %p306
    %p309 = scmp.ne.s32.totalorder %s294, %s308
    %p310 = scmp.eq.s32.totalorder %s28, 0
    %p311 = por %p309, %p310
    %s313 = sadd.s32 %s312, 1
    %p316 = scmp.eq.s32.totalorder %s22, 1
    %p317 = scmp.ne.s32.totalorder %s312, %s314
    %p318 = scmp.eq.s32.totalorder %s22, 0
    %p319 = por %p317, %p318
    %p320 = scmp.ne.s32.totalorder %s312, %s314
    %p321 = scmp.eq.s32.totalorder %s27, 1
    %p322 = por %p320, %p321
    %p323 = scmp.ne.s32.totalorder %s314, %s315
    %p324 = scmp.eq.s32.totalorder %s27, 0
    %p325 = por %p323, %p324
    %p326 = scmp.ne.s32.totalorder %s314, %s315
    %p327 = scmp.eq.s32.totalorder %s28, 1
    %p328 = por %p326, %p327
    %p330 = scmp.ne.s32.totalorder %s315, %s329
    %p331 = scmp.eq.s32.totalorder %s28, 0
    %p332 = por %p330, %p331
    %s334 = sadd.s32 %s333, 1
    %p337 = scmp.eq.s32.totalorder %s22, 1
    %p338 = scmp.ne.s32.totalorder %s333, %s335
    %p339 = scmp.eq.s32.totalorder %s22, 0
    %p340 = por %p338, %p339
    %p341 = scmp.ne.s32.totalorder %s333, %s335
    %p342 = scmp.eq.s32.totalorder %s27, 1
    %p343 = por %p341, %p342
    %p344 = scmp.ne.s32.totalorder %s335, %s336
    %p345 = scmp.eq.s32.totalorder %s27, 0
    %p346 = por %p344, %p345
    %p347 = scmp.ne.s32.totalorder %s335, %s336
    %p348 = scmp.eq.s32.totalorder %s28, 1
    %p349 = por %p347, %p348
    %p351 = scmp.ne.s32.totalorder %s336, %s350
    %p352 = scmp.eq.s32.totalorder %s28, 0
    %p353 = por %p351, %p352
    %s355 = sadd.s32 %s354, 1
    %p358 = scmp.eq.s32.totalorder %s22, 1
    %p359 = scmp.ne.s32.totalorder %s354, %s356
    %p360 = scmp.eq.s32.totalorder %s22, 0
    %p361 = por %p359, %p360
    %p362 = scmp.ne.s32.totalorder %s354, %s356
    %p363 = scmp.eq.s32.totalorder %s27, 1
    %p364 = por %p362, %p363
    %p365 = scmp.ne.s32.totalorder %s356, %s357
    %p366 = scmp.eq.s32.totalorder %s27, 0
    %p367 = por %p365, %p366
    %p368 = scmp.ne.s32.totalorder %s356, %s357
    %p369 = scmp.eq.s32.totalorder %s28, 1
    %p370 = por %p368, %p369
    %p372 = scmp.ne.s32.totalorder %s357, %s371
    %p373 = scmp.eq.s32.totalorder %s28, 0
    %p374 = por %p372, %p373
    %s376 = sadd.s32 %s375, 1
    %p379 = scmp.eq.s32.totalorder %s22, 1
    %p380 = scmp.ne.s32.totalorder %s375, %s377
    %p381 = scmp.eq.s32.totalorder %s22, 0
    %p382 = por %p380, %p381
    %p383 = scmp.ne.s32.totalorder %s375, %s377
    %p384 = scmp.eq.s32.totalorder %s27, 1
    %p385 = por %p383, %p384
    %p386 = scmp.ne.s32.totalorder %s377, %s378
    %p387 = scmp.eq.s32.totalorder %s27, 0
    %p388 = por %p386, %p387
    %p389 = scmp.ne.s32.totalorder %s377, %s378
    %p390 = scmp.eq.s32.totalorder %s28, 1
    %p391 = por %p389, %p390
    %p393 = scmp.ne.s32.totalorder %s378, %s392
    %p394 = scmp.eq.s32.totalorder %s28, 0
    %p395 = por %p393, %p394
    %s396 = ssub.s32 %s22, %s29
    %p397 = scmp.eq.s32.totalorder %s396, 0
    %s399 = sadd.s32 %s398, 1
    %s400 = scalar_select %p397, %s398, %s399
    %p403 = pneg %p397
    %p404 = scmp.eq.s32.totalorder %s22, 1
    %p405 = por %p403, %p404
    %p406 = scmp.ne.s32.totalorder %s398, %s401
    %p407 = scmp.eq.s32.totalorder %s22, 0
    %p408 = por %p406, %p407
    %p409 = scmp.ne.s32.totalorder %s398, %s401
    %p410 = scmp.eq.s32.totalorder %s27, 1
    %p411 = por %p409, %p410
    %p412 = scmp.ne.s32.totalorder %s401, %s402
    %p413 = scmp.eq.s32.totalorder %s27, 0
    %p414 = por %p412, %p413
    %p415 = scmp.ne.s32.totalorder %s401, %s402
    %p416 = scmp.eq.s32.totalorder %s28, 1
    %p417 = por %p415, %p416
    %p419 = scmp.ne.s32.totalorder %s402, %s418
    %p420 = scmp.eq.s32.totalorder %s28, 0
    %p421 = por %p419, %p420
    %p422 = scmp.le.s32.totalorder 1, %s22
    %p423 = scmp.lt.s32.totalorder %s22, 3
    %p424 = pnand %p422, %p423
    %p425 = pneg %p424
    // Predicated region
    $region9: #{recursive_encoder_forward.1} parent=5 // pred_check
      _
    $region10: #{recursive_encoder_forward.1} parent=5 // pred_check_branch
      %427 = sbr.rel (%p424) target = $region12
    $region11: #{recursive_encoder_forward.1} parent=5 // pred_region
      %s428 = ssub.s32 %s22, 1
      // Predicated region
      $region13: #{recursive_encoder_forward.1} parent=11 // pred_check
        %p429 = pneg %p199
      $region14: #{recursive_encoder_forward.1} parent=11 // pred_check_branch
        %431 = sbr.rel (%p429) target = $region16
      $region15: #{recursive_encoder_forward.1} parent=11 // pred_region
        _
      $region16: #{recursive_encoder_forward.1} parent=11 // pred_fallthru
        _
      // Predicated region
      $region17: #{recursive_encoder_forward.1} parent=11 // pred_check
        %p432 = pneg %p220
      $region18: #{recursive_encoder_forward.1} parent=11 // pred_check_branch
        %434 = sbr.rel (%p432) target = $region20
      $region19: #{recursive_encoder_forward.1} parent=11 // pred_region
        _
      $region20: #{recursive_encoder_forward.1} parent=11 // pred_fallthru
        _
      // Predicated region
      $region21: #{recursive_encoder_forward.1} parent=11 // pred_check
        %p435 = pneg %p241
      $region22: #{recursive_encoder_forward.1} parent=11 // pred_check_branch
        %437 = sbr.rel (%p435) target = $region24
      $region23: #{recursive_encoder_forward.1} parent=11 // pred_region
        _
      $region24: #{recursive_encoder_forward.1} parent=11 // pred_fallthru
        _
      // Predicated region
      $region25: #{recursive_encoder_forward.1} parent=11 // pred_check
        %p438 = pneg %p262
      $region26: #{recursive_encoder_forward.1} parent=11 // pred_check_branch
        %440 = sbr.rel (%p438) target = $region28
      $region27: #{recursive_encoder_forward.1} parent=11 // pred_region
        _
      $region28: #{recursive_encoder_forward.1} parent=11 // pred_fallthru
        _
      // Predicated region
      $region29: #{recursive_encoder_forward.1} parent=11 // pred_check
        %p441 = pneg %p283
      $region30: #{recursive_encoder_forward.1} parent=11 // pred_check_branch
        %443 = sbr.rel (%p441) target = $region32
      $region31: #{recursive_encoder_forward.1} parent=11 // pred_region
        _
      $region32: #{recursive_encoder_forward.1} parent=11 // pred_fallthru
        _
      // Predicated region
      $region33: #{recursive_encoder_forward.1} parent=11 // pred_check
        %p444 = pneg %p304
      $region34: #{recursive_encoder_forward.1} parent=11 // pred_check_branch
        %446 = sbr.rel (%p444) target = $region36
      $region35: #{recursive_encoder_forward.1} parent=11 // pred_region
        _
      $region36: #{recursive_encoder_forward.1} parent=11 // pred_fallthru
        _
      // Predicated region
      $region37: #{recursive_encoder_forward.1} parent=11 // pred_check
        %p447 = pneg %p325
      $region38: #{recursive_encoder_forward.1} parent=11 // pred_check_branch
        %449 = sbr.rel (%p447) target = $region40
      $region39: #{recursive_encoder_forward.1} parent=11 // pred_region
        _
      $region40: #{recursive_encoder_forward.1} parent=11 // pred_fallthru
        _
      // Predicated region
      $region41: #{recursive_encoder_forward.1} parent=11 // pred_check
        %p450 = pneg %p346
      $region42: #{recursive_encoder_forward.1} parent=11 // pred_check_branch
        %452 = sbr.rel (%p450) target = $region44
      $region43: #{recursive_encoder_forward.1} parent=11 // pred_region
        _
      $region44: #{recursive_encoder_forward.1} parent=11 // pred_fallthru
        _
      // Predicated region
      $region45: #{recursive_encoder_forward.1} parent=11 // pred_check
        %p453 = pneg %p367
      $region46: #{recursive_encoder_forward.1} parent=11 // pred_check_branch
        %455 = sbr.rel (%p453) target = $region48
      $region47: #{recursive_encoder_forward.1} parent=11 // pred_region
        _
      $region48: #{recursive_encoder_forward.1} parent=11 // pred_fallthru
        _
      // Predicated region
      $region49: #{recursive_encoder_forward.1} parent=11 // pred_check
        %p456 = pneg %p388
      $region50: #{recursive_encoder_forward.1} parent=11 // pred_check_branch
        %458 = sbr.rel (%p456) target = $region52
      $region51: #{recursive_encoder_forward.1} parent=11 // pred_region
        _
      $region52: #{recursive_encoder_forward.1} parent=11 // pred_fallthru
        _
    $region12: #{recursive_encoder_forward.1} parent=5 // pred_fallthru
      _
    %p459 = scmp.lt.s32.totalorder %s22, 2
    // Predicated region
    $region53: #{recursive_encoder_forward.1} parent=5 // pred_check
      %p460 = pneg %p459
    $region54: #{recursive_encoder_forward.1} parent=5 // pred_check_branch
      %462 = sbr.rel (%p460) target = $region56
    $region55: #{recursive_encoder_forward.1} parent=5 // pred_region
      // Predicated region
      $region57: #{recursive_encoder_forward.1} parent=55 // pred_check
        %p463 = pneg %p42
      $region58: #{recursive_encoder_forward.1} parent=55 // pred_check_branch
        %465 = sbr.rel (%p463) target = $region60
      $region59: #{recursive_encoder_forward.1} parent=55 // pred_region
        %s466 = smul.u32 16, %s22
        %p467 = scmp.lt.s32.totalorder %s466, 31
        %s468 = scalar_select %p467, %s466, 31
        %s469 = smul.addr %s468, 8
        %s470 = scalar_lea.vmem %s0, %s469
        %s471 = smul.u32 16, %s22
      $region60: #{recursive_encoder_forward.1} parent=55 // pred_fallthru
        _
      // Predicated region
      $region61: #{recursive_encoder_forward.1} parent=55 // pred_check
        %p472 = pneg %p68
      $region62: #{recursive_encoder_forward.1} parent=55 // pred_check_branch
        %474 = sbr.rel (%p472) target = $region64
      $region63: #{recursive_encoder_forward.1} parent=55 // pred_region
        %s475 = smul.u32 16, %s22
        %p476 = scmp.lt.s32.totalorder %s475, 31
        %s477 = scalar_select %p476, %s475, 31
        %s478 = smul.addr %s477, 8
        %s479 = scalar_lea.vmem %s1, %s478
        %s480 = smul.u32 16, %s22
      $region64: #{recursive_encoder_forward.1} parent=55 // pred_fallthru
        _
      // Predicated region
      $region65: #{recursive_encoder_forward.1} parent=55 // pred_check
        %p481 = pneg %p94
      $region66: #{recursive_encoder_forward.1} parent=55 // pred_check_branch
        %483 = sbr.rel (%p481) target = $region68
      $region67: #{recursive_encoder_forward.1} parent=55 // pred_region
        %s484 = smul.u32 16, %s22
        %p485 = scmp.lt.s32.totalorder %s484, 31
        %s486 = scalar_select %p485, %s484, 31
        %s487 = smul.addr %s486, 8
        %s488 = scalar_lea.vmem %s2, %s487
        %s489 = smul.u32 16, %s22
      $region68: #{recursive_encoder_forward.1} parent=55 // pred_fallthru
        _
      // Predicated region
      $region69: #{recursive_encoder_forward.1} parent=55 // pred_check
        %p490 = pneg %p120
      $region70: #{recursive_encoder_forward.1} parent=55 // pred_check_branch
        %492 = sbr.rel (%p490) target = $region72
      $region71: #{recursive_encoder_forward.1} parent=55 // pred_region
        %s493 = smul.u32 16, %s22
        %p494 = scmp.lt.s32.totalorder %s493, 31
        %s495 = scalar_select %p494, %s493, 31
        %s496 = smul.addr %s495, 8
        %s497 = scalar_lea.vmem %s3, %s496
        %s498 = smul.u32 16, %s22
      $region72: #{recursive_encoder_forward.1} parent=55 // pred_fallthru
        _
      // Predicated region
      $region73: #{recursive_encoder_forward.1} parent=55 // pred_check
        %p499 = pneg %p146
      $region74: #{recursive_encoder_forward.1} parent=55 // pred_check_branch
        %501 = sbr.rel (%p499) target = $region76
      $region75: #{recursive_encoder_forward.1} parent=55 // pred_region
        %s502 = smul.u32 16, %s22
        %p503 = scmp.lt.s32.totalorder %s502, 31
        %s504 = scalar_select %p503, %s502, 31
        %s505 = smul.addr %s504, 8
        %s506 = scalar_lea.vmem %s4, %s505
        %s507 = smul.u32 16, %s22
      $region76: #{recursive_encoder_forward.1} parent=55 // pred_fallthru
        _
      // Predicated region
      $region77: #{recursive_encoder_forward.1} parent=55 // pred_check
        %p508 = pneg %p172
      $region78: #{recursive_encoder_forward.1} parent=55 // pred_check_branch
        %510 = sbr.rel (%p508) target = $region80
      $region79: #{recursive_encoder_forward.1} parent=55 // pred_region
        %s511 = smul.u32 16, %s22
        %p512 = scmp.lt.s32.totalorder %s511, 31
        %s513 = scalar_select %p512, %s511, 31
        %s514 = smul.addr %s513, 8
        %s515 = scalar_lea.vmem %s5, %s514
        %s516 = smul.u32 16, %s22
      $region80: #{recursive_encoder_forward.1} parent=55 // pred_fallthru
        _
    $region56: #{recursive_encoder_forward.1} parent=5 // pred_fallthru
      _
    %p517 = scmp.le.s32.totalorder 1, %s22
    %p518 = scmp.lt.s32.totalorder %s22, 3
    %p519 = pnand %p517, %p518
    %p520 = pneg %p519
    // Predicated region
    $region81: #{recursive_encoder_forward.1} parent=5 // pred_check
      _
    $region82: #{recursive_encoder_forward.1} parent=5 // pred_check_branch
      %522 = sbr.rel (%p519) target = $region84
    $region83: #{recursive_encoder_forward.1} parent=5 // pred_region
      %s523 = ssub.s32 %s22, 1
      %s524 = smul.u32 16, %s27
      %p525 = scmp.lt.s32.totalorder %s524, 31
      %s526 = scalar_select %p525, %s524, 31
      %s527 = smul.addr %s526, 8
      %s528 = scalar_lea.vmem %s0, %s527
      %p529 = pneg %p48
      %p530 = pneg %p45
      %s531 = smul.u32 16, %s27
      %p532 = scmp.lt.s32.totalorder %s531, 31
      %s533 = scalar_select %p532, %s531, 31
      %s534 = smul.addr %s533, 8
      %s535 = scalar_lea.vmem %s1, %s534
      %p536 = pneg %p74
      %p537 = pneg %p71
      %s538 = smul.u32 16, %s27
      %p539 = scmp.lt.s32.totalorder %s538, 31
      %s540 = scalar_select %p539, %s538, 31
      %s541 = smul.addr %s540, 8
      %s542 = scalar_lea.vmem %s2, %s541
      %p543 = pneg %p100
      %p544 = pneg %p97
      %s545 = smul.u32 16, %s27
      %p546 = scmp.lt.s32.totalorder %s545, 31
      %s547 = scalar_select %p546, %s545, 31
      %s548 = smul.addr %s547, 8
      %s549 = scalar_lea.vmem %s3, %s548
      %p550 = pneg %p126
      %p551 = pneg %p123
      %s552 = smul.u32 16, %s27
      %p553 = scmp.lt.s32.totalorder %s552, 31
      %s554 = scalar_select %p553, %s552, 31
      %s555 = smul.addr %s554, 8
      %s556 = scalar_lea.vmem %s4, %s555
      %p557 = pneg %p152
      %p558 = pneg %p149
      %s559 = smul.u32 16, %s27
      %p560 = scmp.lt.s32.totalorder %s559, 31
      %s561 = scalar_select %p560, %s559, 31
      %s562 = smul.addr %s561, 8
      %s563 = scalar_lea.vmem %s5, %s562
      %p564 = pneg %p178
      %p565 = pneg %p175
      %p566 = pneg %p199
      %p567 = pneg %p196
      %p568 = pneg %p220
      %p569 = pneg %p217
      %p570 = pneg %p241
      %p571 = pneg %p238
      %p572 = pneg %p262
      %p573 = pneg %p259
      %p574 = pneg %p283
      %p575 = pneg %p280
      %p576 = pneg %p304
      %p577 = pneg %p301
      %p578 = pneg %p325
      %p579 = pneg %p322
      %p580 = pneg %p346
      %p581 = pneg %p343
      %p582 = pneg %p367
      %p583 = pneg %p364
      %p584 = pneg %p388
      %p585 = pneg %p385
      %p586 = pneg %p414
      %p587 = pneg %p411
      %s588 = smul.u32 16, %s27
      %p589 = scmp.lt.s32.totalorder %s588, 31
      %s590 = scalar_select %p589, %s588, 31
      %s591 = smul.addr %s590, 8
      %s592 = scalar_lea.vmem %s16, %s591
      %s593 = smul.u32 16, %s27
      %p594 = scmp.lt.s32.totalorder %s593, 31
      %s595 = scalar_select %p594, %s593, 31
      %s596 = smul.addr %s595, 8
      %s597 = scalar_lea.vmem %s0, %s596
      %s598 = smul.u32 16, %s27
      %s599 = smul.u32 16, %s27
      %p600 = scmp.lt.s32.totalorder %s599, 31
      %s601 = scalar_select %p600, %s599, 31
      %s602 = smul.addr %s601, 8
      %s603 = scalar_lea.vmem %s1, %s602
      %s604 = smul.u32 16, %s27
      %s605 = smul.u32 16, %s27
      %p606 = scmp.lt.s32.totalorder %s605, 31
      %s607 = scalar_select %p606, %s605, 31
      %s608 = smul.addr %s607, 8
      %s609 = scalar_lea.vmem %s2, %s608
      %s610 = smul.u32 16, %s27
      %s611 = smul.u32 16, %s27
      %p612 = scmp.lt.s32.totalorder %s611, 31
      %s613 = scalar_select %p612, %s611, 31
      %s614 = smul.addr %s613, 8
      %s615 = scalar_lea.vmem %s3, %s614
      %s616 = smul.u32 16, %s27
      %s617 = smul.u32 16, %s27
      %p618 = scmp.lt.s32.totalorder %s617, 31
      %s619 = scalar_select %p618, %s617, 31
      %s620 = smul.addr %s619, 8
      %s621 = scalar_lea.vmem %s4, %s620
      %s622 = smul.u32 16, %s27
      %s623 = smul.u32 16, %s27
      %p624 = scmp.lt.s32.totalorder %s623, 31
      %s625 = scalar_select %p624, %s623, 31
      %s626 = smul.addr %s625, 8
      %s627 = scalar_lea.vmem %s5, %s626
      %s628 = smul.u32 16, %s27
      %s629 = smul.u32 16, %s27
      %p630 = scmp.lt.s32.totalorder %s629, 31
      %s631 = scalar_select %p630, %s629, 31
      %s632 = smul.addr %s631, 8
      %s633 = scalar_lea.vmem %s16, %s632
      %s634 = smul.u32 16, %s27
      %v636 = vld [vmem:[%s597] sm:$0xff]
      %v637 = vld [vmem:[%s597 + $0x8] sm:$0xff]
      %v638 = vld [vmem:[%s597 + $0x10] sm:$0xff]
      %v639 = vld [vmem:[%s597 + $0x18] sm:$0xff]
      %v640 = vld [vmem:[%s597 + $0x20] sm:$0xff]
      %v641 = vld [vmem:[%s597 + $0x28] sm:$0xff]
      %v642 = vld [vmem:[%s597 + $0x30] sm:$0xff]
      %v643 = vld [vmem:[%s597 + $0x38] sm:$0xff]
      %v644 = vld [vmem:[%s597 + $0x40] sm:$0xff]
      %v645 = vld [vmem:[%s597 + $0x48] sm:$0xff]
      %v646 = vld [vmem:[%s597 + $0x50] sm:$0xff]
      %v647 = vld [vmem:[%s597 + $0x58] sm:$0xff]
      %v648 = vld [vmem:[%s597 + $0x60] sm:$0xff]
      %v649 = vld [vmem:[%s597 + $0x68] sm:$0xff]
      %v650 = vld [vmem:[%s597 + $0x70] sm:$0xff]
      %v651 = vld [vmem:[%s597 + $0x78] sm:$0xff]
      %v652 = vld [vmem:[%s603] sm:$0xff]
      %v653 = vld [vmem:[%s603 + $0x8] sm:$0xff]
      %v654 = vld [vmem:[%s603 + $0x10] sm:$0xff]
      %v655 = vld [vmem:[%s603 + $0x18] sm:$0xff]
      %v656 = vld [vmem:[%s603 + $0x20] sm:$0xff]
      %v657 = vld [vmem:[%s603 + $0x28] sm:$0xff]
      %v658 = vld [vmem:[%s603 + $0x30] sm:$0xff]
      %v659 = vld [vmem:[%s603 + $0x38] sm:$0xff]
      %v660 = vld [vmem:[%s603 + $0x40] sm:$0xff]
      %v661 = vld [vmem:[%s603 + $0x48] sm:$0xff]
      %v662 = vld [vmem:[%s603 + $0x50] sm:$0xff]
      %v663 = vld [vmem:[%s603 + $0x58] sm:$0xff]
      %v664 = vld [vmem:[%s603 + $0x60] sm:$0xff]
      %v665 = vld [vmem:[%s603 + $0x68] sm:$0xff]
      %v666 = vld [vmem:[%s603 + $0x70] sm:$0xff]
      %v667 = vld [vmem:[%s603 + $0x78] sm:$0xff]
      %v668 = vadd.f32 %v636, %v652
      %v669 = vadd.f32 %v637, %v653
      %v670 = vadd.f32 %v638, %v654
      %v671 = vadd.f32 %v639, %v655
      %v672 = vadd.f32 %v640, %v656
      %v673 = vadd.f32 %v641, %v657
      %v674 = vadd.f32 %v642, %v658
      %v675 = vadd.f32 %v643, %v659
      %v676 = vadd.f32 %v644, %v660
      %v677 = vadd.f32 %v645, %v661
      %v678 = vadd.f32 %v646, %v662
      %v679 = vadd.f32 %v647, %v663
      %v680 = vadd.f32 %v648, %v664
      %v681 = vadd.f32 %v649, %v665
      %v682 = vadd.f32 %v650, %v666
      %v683 = vadd.f32 %v651, %v667
      %v684 = vpack.c.bf16 %v669, %v668
      %v685 = vpack.c.bf16 %v671, %v670
      %v686 = vpack.c.bf16 %v673, %v672
      %v687 = vpack.c.bf16 %v675, %v674
      %v688 = vpack.c.bf16 %v677, %v676
      %v689 = vpack.c.bf16 %v679, %v678
      %v690 = vpack.c.bf16 %v681, %v680
      %v691 = vpack.c.bf16 %v683, %v682
      %v692 = vld [vmem:[%s6] sm:$0xf]
      %v693 = vld [vmem:[%s6 + $0x4] sm:$0xf]
      %v694 = vld [vmem:[%s6 + $0x8] sm:$0xf]
      %v695 = vld [vmem:[%s6 + $0xc] sm:$0xf]
      %v696 = vld [vmem:[%s7] sm:$0x1]
      %v698 = vlaneseq
      %v699 = vshrl.u32 %v698, 7
      %v700 = vsub.s32 0, %v699
      %v701 = vrot.slane %v696, %v700
      %v707 = vunpack.c.l.b16 %v692
      %v708 = vunpack.c.l.b16 %v693
      %v709 = vunpack.c.l.b16 %v694
      %v710 = vunpack.c.l.b16 %v695
      %v711 = vpack.c.b16 %v708, %v707
      %v712 = vpack.c.b16 %v710, %v709
      %vm715 = vcmask 261120
      %v717 = vsel %vm715, %v684, 0
      %v720 = vsel %vm715, %v685, 0
      %v723 = vsel %vm715, %v686, 0
      %v726 = vsel %vm715, %v687, 0
      %v729 = vsel %vm715, %v688, 0
      %v732 = vsel %vm715, %v689, 0
      %v735 = vsel %vm715, %v690, 0
      %v738 = vsel %vm715, %v691, 0
      %740 = vmatprep.subr.bf16.mxu0 0
      %741 = vmatpush1.bf16.msra.mxu0 %v711
      %742 = vmatprep.subr.bf16.mxu0 0
      %743 = vmatpush1.bf16.msra.mxu0 %v712
      %744 = vmatprep.subr.bf16.mxu0 0
      %745 = vmatpush1.bf16.msra.mxu0 0
      %746 = vmatprep.subr.bf16.mxu0 0
      %747 = vmatpush1.bf16.msra.mxu0 0
      %748 = vmatprep.subr.bf16.mxu0 0
      %749 = vmatpush1.bf16.msra.mxu0 0
      %750 = vmatprep.subr.bf16.mxu0 0
      %751 = vmatpush1.bf16.msra.mxu0 0
      %752 = vmatprep.subr.bf16.mxu0 0
      %753 = vmatpush1.bf16.msra.mxu0 0
      %754 = vmatprep.subr.bf16.mxu0 0
      %755 = vmatpush1.bf16.msra.mxu0 0
      %756 = vmatprep.subr.bf16.mxu0 0
      %757 = vmatpush1.bf16.msra.mxu0 0
      %758 = vmatprep.subr.bf16.mxu0 0
      %759 = vmatpush1.bf16.msra.mxu0 0
      %760 = vmatprep.subr.bf16.mxu0 0
      %761 = vmatpush1.bf16.msra.mxu0 0
      %762 = vmatprep.subr.bf16.mxu0 0
      %763 = vmatpush1.bf16.msra.mxu0 0
      %764 = vmatprep.subr.bf16.mxu0 0
      %765 = vmatpush1.bf16.msra.mxu0 0
      %766 = vmatprep.subr.bf16.mxu0 0
      %767 = vmatpush1.bf16.msra.mxu0 0
      %768 = vmatprep.subr.bf16.mxu0 0
      %769 = vmatpush1.bf16.msra.mxu0 0
      %770 = vmatprep.subr.bf16.mxu0 0
      %771 = vmatpush1.bf16.msra.mxu0 0
      %772 = vmatprep.mubr.bf16.mxu0 0
      %773 = vmatmul.mubr.bf16.gmra.mrb[0].mxu0 %v717
      %v774 = vpop.f32.mrb[0].mxu0
      %v775 = vadd.f32 %v701, %v774
      %v776 = vpop.f32.mrb[0].mxu0
      %v777 = vpop.f32.mrb[0].mxu0
      %v778 = vadd.f32 %v701, %v777
      %v779 = vpop.f32.mrb[0].mxu0
      %780 = vmatprep.mubr.bf16.mxu0 0
      %781 = vmatmul.mubr.bf16.gmra.mrb[0].mxu0 %v720
      %v782 = vpop.f32.mrb[0].mxu0
      %v783 = vadd.f32 %v701, %v782
      %v784 = vpop.f32.mrb[0].mxu0
      %v785 = vpop.f32.mrb[0].mxu0
      %v786 = vadd.f32 %v701, %v785
      %v787 = vpop.f32.mrb[0].mxu0
      %788 = vmatprep.mubr.bf16.mxu0 0
      %789 = vmatmul.mubr.bf16.gmra.mrb[0].mxu0 %v723
      %v790 = vpop.f32.mrb[0].mxu0
      %v791 = vadd.f32 %v701, %v790
      %v792 = vpop.f32.mrb[0].mxu0
      %v793 = vpop.f32.mrb[0].mxu0
      %v794 = vadd.f32 %v701, %v793
      %v795 = vpop.f32.mrb[0].mxu0
      %796 = vmatprep.mubr.bf16.mxu0 0
      %797 = vmatmul.mubr.bf16.gmra.mrb[0].mxu0 %v726
      %v798 = vpop.f32.mrb[0].mxu0
      %v799 = vadd.f32 %v701, %v798
      %v800 = vpop.f32.mrb[0].mxu0
      %v801 = vpop.f32.mrb[0].mxu0
      %v802 = vadd.f32 %v701, %v801
      %v803 = vpop.f32.mrb[0].mxu0
      %804 = vmatprep.mubr.bf16.mxu0 0
      %805 = vmatmul.mubr.bf16.gmra.mrb[0].mxu0 %v729
      %v806 = vpop.f32.mrb[0].mxu0
      %v807 = vadd.f32 %v701, %v806
      %v808 = vpop.f32.mrb[0].mxu0
      %v809 = vpop.f32.mrb[0].mxu0
      %v810 = vadd.f32 %v701, %v809
      %v811 = vpop.f32.mrb[0].mxu0
      %812 = vmatprep.mubr.bf16.mxu0 0
      %813 = vmatmul.mubr.bf16.gmra.mrb[0].mxu0 %v732
      %v814 = vpop.f32.mrb[0].mxu0
      %v815 = vadd.f32 %v701, %v814
      %v816 = vpop.f32.mrb[0].mxu0
      %v817 = vpop.f32.mrb[0].mxu0
      %v818 = vadd.f32 %v701, %v817
      %v819 = vpop.f32.mrb[0].mxu0
      %820 = vmatprep.mubr.bf16.mxu0 0
      %821 = vmatmul.mubr.bf16.gmra.mrb[0].mxu0 %v735
      %v822 = vpop.f32.mrb[0].mxu0
      %v823 = vadd.f32 %v701, %v822
      %v824 = vpop.f32.mrb[0].mxu0
      %v825 = vpop.f32.mrb[0].mxu0
      %v826 = vadd.f32 %v701, %v825
      %v827 = vpop.f32.mrb[0].mxu0
      %828 = vmatprep.mubr.bf16.mxu0 0
      %829 = vmatmul.mubr.bf16.gmra.mrb[0].mxu0 %v738
      %v830 = vpop.f32.mrb[0].mxu0
      %v831 = vadd.f32 %v701, %v830
      %v832 = vpop.f32.mrb[0].mxu0
      %v833 = vpop.f32.mrb[0].mxu0
      %v834 = vadd.f32 %v701, %v833
      %v835 = vpop.f32.mrb[0].mxu0
      %836 = vdwg.mxu0
      %v837 = vtanh.pop %v775
      %v838 = vtanh.pop %v778
      %v839 = vtanh.pop %v783
      %v840 = vtanh.pop %v786
      %v841 = vtanh.pop %v791
      %v842 = vtanh.pop %v794
      %v843 = vtanh.pop %v799
      %v844 = vtanh.pop %v802
      %v845 = vtanh.pop %v807
      %v846 = vtanh.pop %v810
      %v847 = vtanh.pop %v815
      %v848 = vtanh.pop %v818
      %v849 = vtanh.pop %v823
      %v850 = vtanh.pop %v826
      %v851 = vtanh.pop %v831
      %v852 = vtanh.pop %v834
      %v853 = vpack.c.bf16 %v838, %v837
      %v854 = vpack.c.bf16 %v840, %v839
      %v855 = vpack.c.bf16 %v842, %v841
      %v856 = vpack.c.bf16 %v844, %v843
      %v857 = vpack.c.bf16 %v846, %v845
      %v858 = vpack.c.bf16 %v848, %v847
      %v859 = vpack.c.bf16 %v850, %v849
      %v860 = vpack.c.bf16 %v852, %v851
      %v861 = vld [vmem:[%s609] sm:$0xff]
      %v862 = vld [vmem:[%s609 + $0x8] sm:$0xff]
      %v863 = vld [vmem:[%s609 + $0x10] sm:$0xff]
      %v864 = vld [vmem:[%s609 + $0x18] sm:$0xff]
      %v865 = vld [vmem:[%s609 + $0x20] sm:$0xff]
      %v866 = vld [vmem:[%s609 + $0x28] sm:$0xff]
      %v867 = vld [vmem:[%s609 + $0x30] sm:$0xff]
      %v868 = vld [vmem:[%s609 + $0x38] sm:$0xff]
      %v869 = vld [vmem:[%s609 + $0x40] sm:$0xff]
      %v870 = vld [vmem:[%s609 + $0x48] sm:$0xff]
      %v871 = vld [vmem:[%s609 + $0x50] sm:$0xff]
      %v872 = vld [vmem:[%s609 + $0x58] sm:$0xff]
      %v873 = vld [vmem:[%s609 + $0x60] sm:$0xff]
      %v874 = vld [vmem:[%s609 + $0x68] sm:$0xff]
      %v875 = vld [vmem:[%s609 + $0x70] sm:$0xff]
      %v876 = vld [vmem:[%s609 + $0x78] sm:$0xff]
      %v877 = vld [vmem:[%s615] sm:$0xff]
      %v878 = vld [vmem:[%s615 + $0x8] sm:$0xff]
      %v879 = vld [vmem:[%s615 + $0x10] sm:$0xff]
      %v880 = vld [vmem:[%s615 + $0x18] sm:$0xff]
      %v881 = vld [vmem:[%s615 + $0x20] sm:$0xff]
      %v882 = vld [vmem:[%s615 + $0x28] sm:$0xff]
      %v883 = vld [vmem:[%s615 + $0x30] sm:$0xff]
      %v884 = vld [vmem:[%s615 + $0x38] sm:$0xff]
      %v885 = vld [vmem:[%s615 + $0x40] sm:$0xff]
      %v886 = vld [vmem:[%s615 + $0x48] sm:$0xff]
      %v887 = vld [vmem:[%s615 + $0x50] sm:$0xff]
      %v888 = vld [vmem:[%s615 + $0x58] sm:$0xff]
      %v889 = vld [vmem:[%s615 + $0x60] sm:$0xff]
      %v890 = vld [vmem:[%s615 + $0x68] sm:$0xff]
      %v891 = vld [vmem:[%s615 + $0x70] sm:$0xff]
      %v892 = vld [vmem:[%s615 + $0x78] sm:$0xff]
      %v893 = vadd.f32 %v861, %v877
      %v894 = vadd.f32 %v862, %v878
      %v895 = vadd.f32 %v863, %v879
      %v896 = vadd.f32 %v864, %v880
      %v897 = vadd.f32 %v865, %v881
      %v898 = vadd.f32 %v866, %v882
      %v899 = vadd.f32 %v867, %v883
      %v900 = vadd.f32 %v868, %v884
      %v901 = vadd.f32 %v869, %v885
      %v902 = vadd.f32 %v870, %v886
      %v903 = vadd.f32 %v871, %v887
      %v904 = vadd.f32 %v872, %v888
      %v905 = vadd.f32 %v873, %v889
      %v906 = vadd.f32 %v874, %v890
      %v907 = vadd.f32 %v875, %v891
      %v908 = vadd.f32 %v876, %v892
      %v909 = vpack.c.bf16 %v894, %v893
      %v910 = vpack.c.bf16 %v896, %v895
      %v911 = vpack.c.bf16 %v898, %v897
      %v912 = vpack.c.bf16 %v900, %v899
      %v913 = vpack.c.bf16 %v902, %v901
      %v914 = vpack.c.bf16 %v904, %v903
      %v915 = vpack.c.bf16 %v906, %v905
      %v916 = vpack.c.bf16 %v908, %v907
      %v917 = vld [vmem:[%s8] sm:$0xf]
      %v918 = vld [vmem:[%s8 + $0x4] sm:$0xf]
      %v919 = vld [vmem:[%s8 + $0x8] sm:$0xf]
      %v920 = vld [vmem:[%s8 + $0xc] sm:$0xf]
      %v921 = vld [vmem:[%s9] sm:$0xf]
      %v922 = vld [vmem:[%s9 + $0x4] sm:$0xf]
      %v923 = vld [vmem:[%s9 + $0x8] sm:$0xf]
      %v924 = vld [vmem:[%s9 + $0xc] sm:$0xf]
      %v929 = vunpack.c.l.b16 %v921
      %v930 = vunpack.c.l.b16 %v922
      %v931 = vunpack.c.l.b16 %v923
      %v932 = vunpack.c.l.b16 %v924
      %v933 = vpack.c.b16 %v930, %v929
      %v934 = vpack.c.b16 %v932, %v931
      %v938 = vsel %vm715, %v853, 0
      %v941 = vsel %vm715, %v854, 0
      %v944 = vsel %vm715, %v855, 0
      %v947 = vsel %vm715, %v856, 0
      %v950 = vsel %vm715, %v857, 0
      %v953 = vsel %vm715, %v858, 0
      %v956 = vsel %vm715, %v859, 0
      %v959 = vsel %vm715, %v860, 0
      %961 = vmatprep.subr.bf16.mxu0 0
      %962 = vmatpush1.bf16.msra.mxu0 %v933
      %963 = vmatprep.subr.bf16.mxu0 0
      %964 = vmatpush1.bf16.msra.mxu0 %v934
      %965 = vmatprep.subr.bf16.mxu0 0
      %966 = vmatpush1.bf16.msra.mxu0 0
      %967 = vmatprep.subr.bf16.mxu0 0
      %968 = vmatpush1.bf16.msra.mxu0 0
      %969 = vmatprep.subr.bf16.mxu0 0
      %970 = vmatpush1.bf16.msra.mxu0 0
      %971 = vmatprep.subr.bf16.mxu0 0
      %972 = vmatpush1.bf16.msra.mxu0 0
      %973 = vmatprep.subr.bf16.mxu0 0
      %974 = vmatpush1.bf16.msra.mxu0 0
      %975 = vmatprep.subr.bf16.mxu0 0
      %976 = vmatpush1.bf16.msra.mxu0 0
      %977 = vmatprep.subr.bf16.mxu0 0
      %978 = vmatpush1.bf16.msra.mxu0 0
      %979 = vmatprep.subr.bf16.mxu0 0
      %980 = vmatpush1.bf16.msra.mxu0 0
      %981 = vmatprep.subr.bf16.mxu0 0
      %982 = vmatpush1.bf16.msra.mxu0 0
      %983 = vmatprep.subr.bf16.mxu0 0
      %984 = vmatpush1.bf16.msra.mxu0 0
      %985 = vmatprep.subr.bf16.mxu0 0
      %986 = vmatpush1.bf16.msra.mxu0 0
      %987 = vmatprep.subr.bf16.mxu0 0
      %988 = vmatpush1.bf16.msra.mxu0 0
      %989 = vmatprep.subr.bf16.mxu0 0
      %990 = vmatpush1.bf16.msra.mxu0 0
      %991 = vmatprep.subr.bf16.mxu0 0
      %992 = vmatpush1.bf16.msra.mxu0 0
      %993 = vmatprep.mubr.bf16.mxu0 0
      %994 = vmatmul.mubr.bf16.gmra.mrb[0].mxu0 %v938
      %v995 = vpop.f32.mrb[0].mxu0
      %v996 = vadd.f32 0.0, %v995
      %v997 = vpop.f32.mrb[0].mxu0
      %v998 = vpop.f32.mrb[0].mxu0
      %v999 = vadd.f32 0.0, %v998
      %v1000 = vpop.f32.mrb[0].mxu0
      %1001 = vmatprep.mubr.bf16.mxu0 0
      %1002 = vmatmul.mubr.bf16.gmra.mrb[0].mxu0 %v941
      %v1003 = vpop.f32.mrb[0].mxu0
      %v1004 = vadd.f32 0.0, %v1003
      %v1005 = vpop.f32.mrb[0].mxu0
      %v1006 = vpop.f32.mrb[0].mxu0
      %v1007 = vadd.f32 0.0, %v1006
      %v1008 = vpop.f32.mrb[0].mxu0
      %1009 = vmatprep.mubr.bf16.mxu0 0
      %1010 = vmatmul.mubr.bf16.gmra.mrb[0].mxu0 %v944
      %v1011 = vpop.f32.mrb[0].mxu0
      %v1012 = vadd.f32 0.0, %v1011
      %v1013 = vpop.f32.mrb[0].mxu0
      %v1014 = vpop.f32.mrb[0].mxu0
      %v1015 = vadd.f32 0.0, %v1014
      %v1016 = vpop.f32.mrb[0].mxu0
      %1017 = vmatprep.mubr.bf16.mxu0 0
      %1018 = vmatmul.mubr.bf16.gmra.mrb[0].mxu0 %v947
      %v1019 = vpop.f32.mrb[0].mxu0
      %v1020 = vadd.f32 0.0, %v1019
      %v1021 = vpop.f32.mrb[0].mxu0
      %v1022 = vpop.f32.mrb[0].mxu0
      %v1023 = vadd.f32 0.0, %v1022
      %v1024 = vpop.f32.mrb[0].mxu0
      %1025 = vmatprep.mubr.bf16.mxu0 0
      %1026 = vmatmul.mubr.bf16.gmra.mrb[0].mxu0 %v950
      %v1027 = vpop.f32.mrb[0].mxu0
      %v1028 = vadd.f32 0.0, %v1027
      %v1029 = vpop.f32.mrb[0].mxu0
      %v1030 = vpop.f32.mrb[0].mxu0
      %v1031 = vadd.f32 0.0, %v1030
      %v1032 = vpop.f32.mrb[0].mxu0
      %1033 = vmatprep.mubr.bf16.mxu0 0
      %1034 = vmatmul.mubr.bf16.gmra.mrb[0].mxu0 %v953
      %v1035 = vpop.f32.mrb[0].mxu0
      %v1036 = vadd.f32 0.0, %v1035
      %v1037 = vpop.f32.mrb[0].mxu0
      %v1038 = vpop.f32.mrb[0].mxu0
      %v1039 = vadd.f32 0.0, %v1038
      %v1040 = vpop.f32.mrb[0].mxu0
      %1041 = vmatprep.mubr.bf16.mxu0 0
      %1042 = vmatmul.mubr.bf16.gmra.mrb[0].mxu0 %v956
      %v1043 = vpop.f32.mrb[0].mxu0
      %v1044 = vadd.f32 0.0, %v1043
      %v1045 = vpop.f32.mrb[0].mxu0
      %v1046 = vpop.f32.mrb[0].mxu0
      %v1047 = vadd.f32 0.0, %v1046
      %v1048 = vpop.f32.mrb[0].mxu0
      %1049 = vmatprep.mubr.bf16.mxu0 0
      %1050 = vmatmul.mubr.bf16.gmra.mrb[0].mxu0 %v959
      %v1051 = vpop.f32.mrb[0].mxu0
      %v1052 = vadd.f32 0.0, %v1051
      %v1053 = vpop.f32.mrb[0].mxu0
      %v1054 = vpop.f32.mrb[0].mxu0
      %v1055 = vadd.f32 0.0, %v1054
      %v1056 = vpop.f32.mrb[0].mxu0
      %1057 = vdwg.mxu0
      %v1062 = vunpack.c.l.b16 %v917
      %v1063 = vunpack.c.l.b16 %v918
      %v1064 = vunpack.c.l.b16 %v919
      %v1065 = vunpack.c.l.b16 %v920
      %v1066 = vpack.c.b16 %v1063, %v1062
      %v1067 = vpack.c.b16 %v1065, %v1064
      %v1071 = vsel %vm715, %v909, 0
      %v1074 = vsel %vm715, %v910, 0
      %v1077 = vsel %vm715, %v911, 0
      %v1080 = vsel %vm715, %v912, 0
      %v1083 = vsel %vm715, %v913, 0
      %v1086 = vsel %vm715, %v914, 0
      %v1089 = vsel %vm715, %v915, 0
      %v1092 = vsel %vm715, %v916, 0
      %1094 = vmatprep.subr.bf16.mxu0 0
      %1095 = vmatpush1.bf16.msra.mxu0 %v1066
      %1096 = vmatprep.subr.bf16.mxu0 0
      %1097 = vmatpush1.bf16.msra.mxu0 %v1067
      %1098 = vmatprep.subr.bf16.mxu0 0
      %1099 = vmatpush1.bf16.msra.mxu0 0
      %1100 = vmatprep.subr.bf16.mxu0 0
      %1101 = vmatpush1.bf16.msra.mxu0 0
      %1102 = vmatprep.subr.bf16.mxu0 0
      %1103 = vmatpush1.bf16.msra.mxu0 0
      %1104 = vmatprep.subr.bf16.mxu0 0
      %1105 = vmatpush1.bf16.msra.mxu0 0
      %1106 = vmatprep.subr.bf16.mxu0 0
      %1107 = vmatpush1.bf16.msra.mxu0 0
      %1108 = vmatprep.subr.bf16.mxu0 0
      %1109 = vmatpush1.bf16.msra.mxu0 0
      %1110 = vmatprep.subr.bf16.mxu0 0
      %1111 = vmatpush1.bf16.msra.mxu0 0
      %1112 = vmatprep.subr.bf16.mxu0 0
      %1113 = vmatpush1.bf16.msra.mxu0 0
      %1114 = vmatprep.subr.bf16.mxu0 0
      %1115 = vmatpush1.bf16.msra.mxu0 0
      %1116 = vmatprep.subr.bf16.mxu0 0
      %1117 = vmatpush1.bf16.msra.mxu0 0
      %1118 = vmatprep.subr.bf16.mxu0 0
      %1119 = vmatpush1.bf16.msra.mxu0 0
      %1120 = vmatprep.subr.bf16.mxu0 0
      %1121 = vmatpush1.bf16.msra.mxu0 0
      %1122 = vmatprep.subr.bf16.mxu0 0
      %1123 = vmatpush1.bf16.msra.mxu0 0
      %1124 = vmatprep.subr.bf16.mxu0 0
      %1125 = vmatpush1.bf16.msra.mxu0 0
      %1126 = vmatprep.mubr.bf16.mxu0 0
      %1127 = vmatmul.mubr.bf16.gmra.mrb[0].mxu0 %v1071
      %v1128 = vpop.f32.mrb[0].mxu0
      %v1129 = vadd.f32 %v996, %v1128
      %v1130 = vpop.f32.mrb[0].mxu0
      %v1131 = vpop.f32.mrb[0].mxu0
      %v1132 = vadd.f32 %v999, %v1131
      %v1133 = vpop.f32.mrb[0].mxu0
      %1134 = vmatprep.mubr.bf16.mxu0 0
      %1135 = vmatmul.mubr.bf16.gmra.mrb[0].mxu0 %v1074
      %v1136 = vpop.f32.mrb[0].mxu0
      %v1137 = vadd.f32 %v1004, %v1136
      %v1138 = vpop.f32.mrb[0].mxu0
      %v1139 = vpop.f32.mrb[0].mxu0
      %v1140 = vadd.f32 %v1007, %v1139
      %v1141 = vpop.f32.mrb[0].mxu0
      %1142 = vmatprep.mubr.bf16.mxu0 0
      %1143 = vmatmul.mubr.bf16.gmra.mrb[0].mxu0 %v1077
      %v1144 = vpop.f32.mrb[0].mxu0
      %v1145 = vadd.f32 %v1012, %v1144
      %v1146 = vpop.f32.mrb[0].mxu0
      %v1147 = vpop.f32.mrb[0].mxu0
      %v1148 = vadd.f32 %v1015, %v1147
      %v1149 = vpop.f32.mrb[0].mxu0
      %1150 = vmatprep.mubr.bf16.mxu0 0
      %1151 = vmatmul.mubr.bf16.gmra.mrb[0].mxu0 %v1080
      %v1152 = vpop.f32.mrb[0].mxu0
      %v1153 = vadd.f32 %v1020, %v1152
      %v1154 = vpop.f32.mrb[0].mxu0
      %v1155 = vpop.f32.mrb[0].mxu0
      %v1156 = vadd.f32 %v1023, %v1155
      %v1157 = vpop.f32.mrb[0].mxu0
      %1158 = vmatprep.mubr.bf16.mxu0 0
      %1159 = vmatmul.mubr.bf16.gmra.mrb[0].mxu0 %v1083
      %v1160 = vpop.f32.mrb[0].mxu0
      %v1161 = vadd.f32 %v1028, %v1160
      %v1162 = vpop.f32.mrb[0].mxu0
      %v1163 = vpop.f32.mrb[0].mxu0
      %v1164 = vadd.f32 %v1031, %v1163
      %v1165 = vpop.f32.mrb[0].mxu0
      %1166 = vmatprep.mubr.bf16.mxu0 0
      %1167 = vmatmul.mubr.bf16.gmra.mrb[0].mxu0 %v1086
      %v1168 = vpop.f32.mrb[0].mxu0
      %v1169 = vadd.f32 %v1036, %v1168
      %v1170 = vpop.f32.mrb[0].mxu0
      %v1171 = vpop.f32.mrb[0].mxu0
      %v1172 = vadd.f32 %v1039, %v1171
      %v1173 = vpop.f32.mrb[0].mxu0
      %1174 = vmatprep.mubr.bf16.mxu0 0
      %1175 = vmatmul.mubr.bf16.gmra.mrb[0].mxu0 %v1089
      %v1176 = vpop.f32.mrb[0].mxu0
      %v1177 = vadd.f32 %v1044, %v1176
      %v1178 = vpop.f32.mrb[0].mxu0
      %v1179 = vpop.f32.mrb[0].mxu0
      %v1180 = vadd.f32 %v1047, %v1179
      %v1181 = vpop.f32.mrb[0].mxu0
      %1182 = vmatprep.mubr.bf16.mxu0 0
      %1183 = vmatmul.mubr.bf16.gmra.mrb[0].mxu0 %v1092
      %v1184 = vpop.f32.mrb[0].mxu0
      %v1185 = vadd.f32 %v1052, %v1184
      %v1186 = vpop.f32.mrb[0].mxu0
      %v1187 = vpop.f32.mrb[0].mxu0
      %v1188 = vadd.f32 %v1055, %v1187
      %v1189 = vpop.f32.mrb[0].mxu0
      %1190 = vdwg.mxu0
      %v1191 = vld [vmem:[%s10] sm:$0x1]
      %v1193 = vlaneseq
      %v1194 = vshrl.u32 %v1193, 7
      %v1195 = vsub.s32 0, %v1194
      %v1196 = vrot.slane %v1191, %v1195
      %v1198 = vadd.f32 %v1129, %v1196
      %v1199 = vadd.f32 %v1132, %v1196
      %v1200 = vadd.f32 %v1137, %v1196
      %v1201 = vadd.f32 %v1140, %v1196
      %v1202 = vadd.f32 %v1145, %v1196
      %v1203 = vadd.f32 %v1148, %v1196
      %v1204 = vadd.f32 %v1153, %v1196
      %v1205 = vadd.f32 %v1156, %v1196
      %v1206 = vadd.f32 %v1161, %v1196
      %v1207 = vadd.f32 %v1164, %v1196
      %v1208 = vadd.f32 %v1169, %v1196
      %v1209 = vadd.f32 %v1172, %v1196
      %v1210 = vadd.f32 %v1177, %v1196
      %v1211 = vadd.f32 %v1180, %v1196
      %v1212 = vadd.f32 %v1185, %v1196
      %v1213 = vadd.f32 %v1188, %v1196
      %v1214 = vtanh.pop %v1198
      %v1215 = vtanh.pop %v1199
      %v1216 = vtanh.pop %v1200
      %v1217 = vtanh.pop %v1201
      %v1218 = vtanh.pop %v1202
      %v1219 = vtanh.pop %v1203
      %v1220 = vtanh.pop %v1204
      %v1221 = vtanh.pop %v1205
      %v1222 = vtanh.pop %v1206
      %v1223 = vtanh.pop %v1207
      %v1224 = vtanh.pop %v1208
      %v1225 = vtanh.pop %v1209
      %v1226 = vtanh.pop %v1210
      %v1227 = vtanh.pop %v1211
      %v1228 = vtanh.pop %v1212
      %v1229 = vtanh.pop %v1213
      %v1230 = vpack.c.bf16 %v1215, %v1214
      %v1231 = vpack.c.bf16 %v1217, %v1216
      %v1232 = vpack.c.bf16 %v1219, %v1218
      %v1233 = vpack.c.bf16 %v1221, %v1220
      %v1234 = vpack.c.bf16 %v1223, %v1222
      %v1235 = vpack.c.bf16 %v1225, %v1224
      %v1236 = vpack.c.bf16 %v1227, %v1226
      %v1237 = vpack.c.bf16 %v1229, %v1228
      %v1238 = vld [vmem:[%s621] sm:$0xff]
      %v1239 = vld [vmem:[%s621 + $0x8] sm:$0xff]
      %v1240 = vld [vmem:[%s621 + $0x10] sm:$0xff]
      %v1241 = vld [vmem:[%s621 + $0x18] sm:$0xff]
      %v1242 = vld [vmem:[%s621 + $0x20] sm:$0xff]
      %v1243 = vld [vmem:[%s621 + $0x28] sm:$0xff]
      %v1244 = vld [vmem:[%s621 + $0x30] sm:$0xff]
      %v1245 = vld [vmem:[%s621 + $0x38] sm:$0xff]
      %v1246 = vld [vmem:[%s621 + $0x40] sm:$0xff]
      %v1247 = vld [vmem:[%s621 + $0x48] sm:$0xff]
      %v1248 = vld [vmem:[%s621 + $0x50] sm:$0xff]
      %v1249 = vld [vmem:[%s621 + $0x58] sm:$0xff]
      %v1250 = vld [vmem:[%s621 + $0x60] sm:$0xff]
      %v1251 = vld [vmem:[%s621 + $0x68] sm:$0xff]
      %v1252 = vld [vmem:[%s621 + $0x70] sm:$0xff]
      %v1253 = vld [vmem:[%s621 + $0x78] sm:$0xff]
      %v1254 = vld [vmem:[%s627] sm:$0xff]
      %v1255 = vld [vmem:[%s627 + $0x8] sm:$0xff]
      %v1256 = vld [vmem:[%s627 + $0x10] sm:$0xff]
      %v1257 = vld [vmem:[%s627 + $0x18] sm:$0xff]
      %v1258 = vld [vmem:[%s627 + $0x20] sm:$0xff]
      %v1259 = vld [vmem:[%s627 + $0x28] sm:$0xff]
      %v1260 = vld [vmem:[%s627 + $0x30] sm:$0xff]
      %v1261 = vld [vmem:[%s627 + $0x38] sm:$0xff]
      %v1262 = vld [vmem:[%s627 + $0x40] sm:$0xff]
      %v1263 = vld [vmem:[%s627 + $0x48] sm:$0xff]
      %v1264 = vld [vmem:[%s627 + $0x50] sm:$0xff]
      %v1265 = vld [vmem:[%s627 + $0x58] sm:$0xff]
      %v1266 = vld [vmem:[%s627 + $0x60] sm:$0xff]
      %v1267 = vld [vmem:[%s627 + $0x68] sm:$0xff]
      %v1268 = vld [vmem:[%s627 + $0x70] sm:$0xff]
      %v1269 = vld [vmem:[%s627 + $0x78] sm:$0xff]
      %v1270 = vadd.f32 %v1238, %v1254
      %v1271 = vadd.f32 %v1239, %v1255
      %v1272 = vadd.f32 %v1240, %v1256
      %v1273 = vadd.f32 %v1241, %v1257
      %v1274 = vadd.f32 %v1242, %v1258
      %v1275 = vadd.f32 %v1243, %v1259
      %v1276 = vadd.f32 %v1244, %v1260
      %v1277 = vadd.f32 %v1245, %v1261
      %v1278 = vadd.f32 %v1246, %v1262
      %v1279 = vadd.f32 %v1247, %v1263
      %v1280 = vadd.f32 %v1248, %v1264
      %v1281 = vadd.f32 %v1249, %v1265
      %v1282 = vadd.f32 %v1250, %v1266
      %v1283 = vadd.f32 %v1251, %v1267
      %v1284 = vadd.f32 %v1252, %v1268
      %v1285 = vadd.f32 %v1253, %v1269
      %v1286 = vpack.c.bf16 %v1271, %v1270
      %v1287 = vpack.c.bf16 %v1273, %v1272
      %v1288 = vpack.c.bf16 %v1275, %v1274
      %v1289 = vpack.c.bf16 %v1277, %v1276
      %v1290 = vpack.c.bf16 %v1279, %v1278
      %v1291 = vpack.c.bf16 %v1281, %v1280
      %v1292 = vpack.c.bf16 %v1283, %v1282
      %v1293 = vpack.c.bf16 %v1285, %v1284
      %v1294 = vld [vmem:[%s11] sm:$0xf]
      %v1295 = vld [vmem:[%s11 + $0x4] sm:$0xf]
      %v1296 = vld [vmem:[%s11 + $0x8] sm:$0xf]
      %v1297 = vld [vmem:[%s11 + $0xc] sm:$0xf]
      %v1298 = vld [vmem:[%s12] sm:$0xf]
      %v1299 = vld [vmem:[%s12 + $0x4] sm:$0xf]
      %v1300 = vld [vmem:[%s12 + $0x8] sm:$0xf]
      %v1301 = vld [vmem:[%s12 + $0xc] sm:$0xf]
      %v1306 = vunpack.c.l.b16 %v1298
      %v1307 = vunpack.c.l.b16 %v1299
      %v1308 = vunpack.c.l.b16 %v1300
      %v1309 = vunpack.c.l.b16 %v1301
      %v1310 = vpack.c.b16 %v1307, %v1306
      %v1311 = vpack.c.b16 %v1309, %v1308
      %v1315 = vsel %vm715, %v1230, 0
      %v1318 = vsel %vm715, %v1231, 0
      %v1321 = vsel %vm715, %v1232, 0
      %v1324 = vsel %vm715, %v1233, 0
      %v1327 = vsel %vm715, %v1234, 0
      %v1330 = vsel %vm715, %v1235, 0
      %v1333 = vsel %vm715, %v1236, 0
      %v1336 = vsel %vm715, %v1237, 0
      %1338 = vmatprep.subr.bf16.mxu0 0
      %1339 = vmatpush1.bf16.msra.mxu0 %v1310
      %1340 = vmatprep.subr.bf16.mxu0 0
      %1341 = vmatpush1.bf16.msra.mxu0 %v1311
      %1342 = vmatprep.subr.bf16.mxu0 0
      %1343 = vmatpush1.bf16.msra.mxu0 0
      %1344 = vmatprep.subr.bf16.mxu0 0
      %1345 = vmatpush1.bf16.msra.mxu0 0
      %1346 = vmatprep.subr.bf16.mxu0 0
      %1347 = vmatpush1.bf16.msra.mxu0 0
      %1348 = vmatprep.subr.bf16.mxu0 0
      %1349 = vmatpush1.bf16.msra.mxu0 0
      %1350 = vmatprep.subr.bf16.mxu0 0
      %1351 = vmatpush1.bf16.msra.mxu0 0
      %1352 = vmatprep.subr.bf16.mxu0 0
      %1353 = vmatpush1.bf16.msra.mxu0 0
      %1354 = vmatprep.subr.bf16.mxu0 0
      %1355 = vmatpush1.bf16.msra.mxu0 0
      %1356 = vmatprep.subr.bf16.mxu0 0
      %1357 = vmatpush1.bf16.msra.mxu0 0
      %1358 = vmatprep.subr.bf16.mxu0 0
      %1359 = vmatpush1.bf16.msra.mxu0 0
      %1360 = vmatprep.subr.bf16.mxu0 0
      %1361 = vmatpush1.bf16.msra.mxu0 0
      %1362 = vmatprep.subr.bf16.mxu0 0
      %1363 = vmatpush1.bf16.msra.mxu0 0
      %1364 = vmatprep.subr.bf16.mxu0 0
      %1365 = vmatpush1.bf16.msra.mxu0 0
      %1366 = vmatprep.subr.bf16.mxu0 0
      %1367 = vmatpush1.bf16.msra.mxu0 0
      %1368 = vmatprep.subr.bf16.mxu0 0
      %1369 = vmatpush1.bf16.msra.mxu0 0
      %1370 = vmatprep.mubr.bf16.mxu0 0
      %1371 = vmatmul.mubr.bf16.gmra.mrb[0].mxu0 %v1315
      %v1372 = vpop.f32.mrb[0].mxu0
      %v1373 = vadd.f32 0.0, %v1372
      %v1374 = vpop.f32.mrb[0].mxu0
      %v1375 = vpop.f32.mrb[0].mxu0
      %v1376 = vadd.f32 0.0, %v1375
      %v1377 = vpop.f32.mrb[0].mxu0
      %1378 = vmatprep.mubr.bf16.mxu0 0
      %1379 = vmatmul.mubr.bf16.gmra.mrb[0].mxu0 %v1318
      %v1380 = vpop.f32.mrb[0].mxu0
      %v1381 = vadd.f32 0.0, %v1380
      %v1382 = vpop.f32.mrb[0].mxu0
      %v1383 = vpop.f32.mrb[0].mxu0
      %v1384 = vadd.f32 0.0, %v1383
      %v1385 = vpop.f32.mrb[0].mxu0
      %1386 = vmatprep.mubr.bf16.mxu0 0
      %1387 = vmatmul.mubr.bf16.gmra.mrb[0].mxu0 %v1321
      %v1388 = vpop.f32.mrb[0].mxu0
      %v1389 = vadd.f32 0.0, %v1388
      %v1390 = vpop.f32.mrb[0].mxu0
      %v1391 = vpop.f32.mrb[0].mxu0
      %v1392 = vadd.f32 0.0, %v1391
      %v1393 = vpop.f32.mrb[0].mxu0
      %1394 = vmatprep.mubr.bf16.mxu0 0
      %1395 = vmatmul.mubr.bf16.gmra.mrb[0].mxu0 %v1324
      %v1396 = vpop.f32.mrb[0].mxu0
      %v1397 = vadd.f32 0.0, %v1396
      %v1398 = vpop.f32.mrb[0].mxu0
      %v1399 = vpop.f32.mrb[0].mxu0
      %v1400 = vadd.f32 0.0, %v1399
      %v1401 = vpop.f32.mrb[0].mxu0
      %1402 = vmatprep.mubr.bf16.mxu0 0
      %1403 = vmatmul.mubr.bf16.gmra.mrb[0].mxu0 %v1327
      %v1404 = vpop.f32.mrb[0].mxu0
      %v1405 = vadd.f32 0.0, %v1404
      %v1406 = vpop.f32.mrb[0].mxu0
      %v1407 = vpop.f32.mrb[0].mxu0
      %v1408 = vadd.f32 0.0, %v1407
      %v1409 = vpop.f32.mrb[0].mxu0
      %1410 = vmatprep.mubr.bf16.mxu0 0
      %1411 = vmatmul.mubr.bf16.gmra.mrb[0].mxu0 %v1330
      %v1412 = vpop.f32.mrb[0].mxu0
      %v1413 = vadd.f32 0.0, %v1412
      %v1414 = vpop.f32.mrb[0].mxu0
      %v1415 = vpop.f32.mrb[0].mxu0
      %v1416 = vadd.f32 0.0, %v1415
      %v1417 = vpop.f32.mrb[0].mxu0
      %1418 = vmatprep.mubr.bf16.mxu0 0
      %1419 = vmatmul.mubr.bf16.gmra.mrb[0].mxu0 %v1333
      %v1420 = vpop.f32.mrb[0].mxu0
      %v1421 = vadd.f32 0.0, %v1420
      %v1422 = vpop.f32.mrb[0].mxu0
      %v1423 = vpop.f32.mrb[0].mxu0
      %v1424 = vadd.f32 0.0, %v1423
      %v1425 = vpop.f32.mrb[0].mxu0
      %1426 = vmatprep.mubr.bf16.mxu0 0
      %1427 = vmatmul.mubr.bf16.gmra.mrb[0].mxu0 %v1336
      %v1428 = vpop.f32.mrb[0].mxu0
      %v1429 = vadd.f32 0.0, %v1428
      %v1430 = vpop.f32.mrb[0].mxu0
      %v1431 = vpop.f32.mrb[0].mxu0
      %v1432 = vadd.f32 0.0, %v1431
      %v1433 = vpop.f32.mrb[0].mxu0
      %1434 = vdwg.mxu0
      %v1439 = vunpack.c.l.b16 %v1294
      %v1440 = vunpack.c.l.b16 %v1295
      %v1441 = vunpack.c.l.b16 %v1296
      %v1442 = vunpack.c.l.b16 %v1297
      %v1443 = vpack.c.b16 %v1440, %v1439
      %v1444 = vpack.c.b16 %v1442, %v1441
      %v1448 = vsel %vm715, %v1286, 0
      %v1451 = vsel %vm715, %v1287, 0
      %v1454 = vsel %vm715, %v1288, 0
      %v1457 = vsel %vm715, %v1289, 0
      %v1460 = vsel %vm715, %v1290, 0
      %v1463 = vsel %vm715, %v1291, 0
      %v1466 = vsel %vm715, %v1292, 0
      %v1469 = vsel %vm715, %v1293, 0
      %1471 = vmatprep.subr.bf16.mxu0 0
      %1472 = vmatpush1.bf16.msra.mxu0 %v1443
      %1473 = vmatprep.subr.bf16.mxu0 0
      %1474 = vmatpush1.bf16.msra.mxu0 %v1444
      %1475 = vmatprep.subr.bf16.mxu0 0
      %1476 = vmatpush1.bf16.msra.mxu0 0
      %1477 = vmatprep.subr.bf16.mxu0 0
      %1478 = vmatpush1.bf16.msra.mxu0 0
      %1479 = vmatprep.subr.bf16.mxu0 0
      %1480 = vmatpush1.bf16.msra.mxu0 0
      %1481 = vmatprep.subr.bf16.mxu0 0
      %1482 = vmatpush1.bf16.msra.mxu0 0
      %1483 = vmatprep.subr.bf16.mxu0 0
      %1484 = vmatpush1.bf16.msra.mxu0 0
      %1485 = vmatprep.subr.bf16.mxu0 0
      %1486 = vmatpush1.bf16.msra.mxu0 0
      %1487 = vmatprep.subr.bf16.mxu0 0
      %1488 = vmatpush1.bf16.msra.mxu0 0
      %1489 = vmatprep.subr.bf16.mxu0 0
      %1490 = vmatpush1.bf16.msra.mxu0 0
      %1491 = vmatprep.subr.bf16.mxu0 0
      %1492 = vmatpush1.bf16.msra.mxu0 0
      %1493 = vmatprep.subr.bf16.mxu0 0
      %1494 = vmatpush1.bf16.msra.mxu0 0
      %1495 = vmatprep.subr.bf16.mxu0 0
      %1496 = vmatpush1.bf16.msra.mxu0 0
      %1497 = vmatprep.subr.bf16.mxu0 0
      %1498 = vmatpush1.bf16.msra.mxu0 0
      %1499 = vmatprep.subr.bf16.mxu0 0
      %1500 = vmatpush1.bf16.msra.mxu0 0
      %1501 = vmatprep.subr.bf16.mxu0 0
      %1502 = vmatpush1.bf16.msra.mxu0 0
      %1503 = vmatprep.mubr.bf16.mxu0 0
      %1504 = vmatmul.mubr.bf16.gmra.mrb[0].mxu0 %v1448
      %v1505 = vpop.f32.mrb[0].mxu0
      %v1506 = vadd.f32 %v1373, %v1505
      %v1507 = vpop.f32.mrb[0].mxu0
      %v1508 = vpop.f32.mrb[0].mxu0
      %v1509 = vadd.f32 %v1376, %v1508
      %v1510 = vpop.f32.mrb[0].mxu0
      %1511 = vmatprep.mubr.bf16.mxu0 0
      %1512 = vmatmul.mubr.bf16.gmra.mrb[0].mxu0 %v1451
      %v1513 = vpop.f32.mrb[0].mxu0
      %v1514 = vadd.f32 %v1381, %v1513
      %v1515 = vpop.f32.mrb[0].mxu0
      %v1516 = vpop.f32.mrb[0].mxu0
      %v1517 = vadd.f32 %v1384, %v1516
      %v1518 = vpop.f32.mrb[0].mxu0
      %1519 = vmatprep.mubr.bf16.mxu0 0
      %1520 = vmatmul.mubr.bf16.gmra.mrb[0].mxu0 %v1454
      %v1521 = vpop.f32.mrb[0].mxu0
      %v1522 = vadd.f32 %v1389, %v1521
      %v1523 = vpop.f32.mrb[0].mxu0
      %v1524 = vpop.f32.mrb[0].mxu0
      %v1525 = vadd.f32 %v1392, %v1524
      %v1526 = vpop.f32.mrb[0].mxu0
      %1527 = vmatprep.mubr.bf16.mxu0 0
      %1528 = vmatmul.mubr.bf16.gmra.mrb[0].mxu0 %v1457
      %v1529 = vpop.f32.mrb[0].mxu0
      %v1530 = vadd.f32 %v1397, %v1529
      %v1531 = vpop.f32.mrb[0].mxu0
      %v1532 = vpop.f32.mrb[0].mxu0
      %v1533 = vadd.f32 %v1400, %v1532
      %v1534 = vpop.f32.mrb[0].mxu0
      %1535 = vmatprep.mubr.bf16.mxu0 0
      %1536 = vmatmul.mubr.bf16.gmra.mrb[0].mxu0 %v1460
      %v1537 = vpop.f32.mrb[0].mxu0
      %v1538 = vadd.f32 %v1405, %v1537
      %v1539 = vpop.f32.mrb[0].mxu0
      %v1540 = vpop.f32.mrb[0].mxu0
      %v1541 = vadd.f32 %v1408, %v1540
      %v1542 = vpop.f32.mrb[0].mxu0
      %1543 = vmatprep.mubr.bf16.mxu0 0
      %1544 = vmatmul.mubr.bf16.gmra.mrb[0].mxu0 %v1463
      %v1545 = vpop.f32.mrb[0].mxu0
      %v1546 = vadd.f32 %v1413, %v1545
      %v1547 = vpop.f32.mrb[0].mxu0
      %v1548 = vpop.f32.mrb[0].mxu0
      %v1549 = vadd.f32 %v1416, %v1548
      %v1550 = vpop.f32.mrb[0].mxu0
      %1551 = vmatprep.mubr.bf16.mxu0 0
      %1552 = vmatmul.mubr.bf16.gmra.mrb[0].mxu0 %v1466
      %v1553 = vpop.f32.mrb[0].mxu0
      %v1554 = vadd.f32 %v1421, %v1553
      %v1555 = vpop.f32.mrb[0].mxu0
      %v1556 = vpop.f32.mrb[0].mxu0
      %v1557 = vadd.f32 %v1424, %v1556
      %v1558 = vpop.f32.mrb[0].mxu0
      %1559 = vmatprep.mubr.bf16.mxu0 0
      %1560 = vmatmul.mubr.bf16.gmra.mrb[0].mxu0 %v1469
      %v1561 = vpop.f32.mrb[0].mxu0
      %v1562 = vadd.f32 %v1429, %v1561
      %v1563 = vpop.f32.mrb[0].mxu0
      %v1564 = vpop.f32.mrb[0].mxu0
      %v1565 = vadd.f32 %v1432, %v1564
      %v1566 = vpop.f32.mrb[0].mxu0
      %1567 = vdwg.mxu0
      %v1568 = vld [vmem:[%s13] sm:$0x1]
      %v1570 = vlaneseq
      %v1571 = vshrl.u32 %v1570, 7
      %v1572 = vsub.s32 0, %v1571
      %v1573 = vrot.slane %v1568, %v1572
      %v1575 = vadd.f32 %v1506, %v1573
      %v1576 = vadd.f32 %v1509, %v1573
      %v1577 = vadd.f32 %v1514, %v1573
      %v1578 = vadd.f32 %v1517, %v1573
      %v1579 = vadd.f32 %v1522, %v1573
      %v1580 = vadd.f32 %v1525, %v1573
      %v1581 = vadd.f32 %v1530, %v1573
      %v1582 = vadd.f32 %v1533, %v1573
      %v1583 = vadd.f32 %v1538, %v1573
      %v1584 = vadd.f32 %v1541, %v1573
      %v1585 = vadd.f32 %v1546, %v1573
      %v1586 = vadd.f32 %v1549, %v1573
      %v1587 = vadd.f32 %v1554, %v1573
      %v1588 = vadd.f32 %v1557, %v1573
      %v1589 = vadd.f32 %v1562, %v1573
      %v1590 = vadd.f32 %v1565, %v1573
      %v1591 = vtanh.pop %v1575
      %v1592 = vtanh.pop %v1576
      %v1593 = vtanh.pop %v1577
      %v1594 = vtanh.pop %v1578
      %v1595 = vtanh.pop %v1579
      %v1596 = vtanh.pop %v1580
      %v1597 = vtanh.pop %v1581
      %v1598 = vtanh.pop %v1582
      %v1599 = vtanh.pop %v1583
      %v1600 = vtanh.pop %v1584
      %v1601 = vtanh.pop %v1585
      %v1602 = vtanh.pop %v1586
      %v1603 = vtanh.pop %v1587
      %v1604 = vtanh.pop %v1588
      %v1605 = vtanh.pop %v1589
      %v1606 = vtanh.pop %v1590
      %v1607 = vpack.c.bf16 %v1592, %v1591
      %v1608 = vpack.c.bf16 %v1594, %v1593
      %v1609 = vpack.c.bf16 %v1596, %v1595
      %v1610 = vpack.c.bf16 %v1598, %v1597
      %v1611 = vpack.c.bf16 %v1600, %v1599
      %v1612 = vpack.c.bf16 %v1602, %v1601
      %v1613 = vpack.c.bf16 %v1604, %v1603
      %v1614 = vpack.c.bf16 %v1606, %v1605
      %v1615 = vld [vmem:[%s14] sm:$0xf]
      %v1616 = vld [vmem:[%s14 + $0x4] sm:$0xf]
      %v1617 = vld [vmem:[%s14 + $0x8] sm:$0xf]
      %v1618 = vld [vmem:[%s14 + $0xc] sm:$0xf]
      %v1619 = vld [vmem:[%s15] sm:$0x1]
      %v1621 = vlaneseq
      %v1622 = vshrl.u32 %v1621, 7
      %v1623 = vsub.s32 0, %v1622
      %v1624 = vrot.slane %v1619, %v1623
      %v1630 = vunpack.c.l.b16 %v1615
      %v1631 = vunpack.c.l.b16 %v1616
      %v1632 = vunpack.c.l.b16 %v1617
      %v1633 = vunpack.c.l.b16 %v1618
      %v1634 = vpack.c.b16 %v1631, %v1630
      %v1635 = vpack.c.b16 %v1633, %v1632
      %v1639 = vsel %vm715, %v1607, 0
      %v1642 = vsel %vm715, %v1608, 0
      %v1645 = vsel %vm715, %v1609, 0
      %v1648 = vsel %vm715, %v1610, 0
      %v1651 = vsel %vm715, %v1611, 0
      %v1654 = vsel %vm715, %v1612, 0
      %v1657 = vsel %vm715, %v1613, 0
      %v1660 = vsel %vm715, %v1614, 0
      %1662 = vmatprep.subr.bf16.mxu0 0
      %1663 = vmatpush1.bf16.msra.mxu0 %v1634
      %1664 = vmatprep.subr.bf16.mxu0 0
      %1665 = vmatpush1.bf16.msra.mxu0 %v1635
      %1666 = vmatprep.subr.bf16.mxu0 0
      %1667 = vmatpush1.bf16.msra.mxu0 0
      %1668 = vmatprep.subr.bf16.mxu0 0
      %1669 = vmatpush1.bf16.msra.mxu0 0
      %1670 = vmatprep.subr.bf16.mxu0 0
      %1671 = vmatpush1.bf16.msra.mxu0 0
      %1672 = vmatprep.subr.bf16.mxu0 0
      %1673 = vmatpush1.bf16.msra.mxu0 0
      %1674 = vmatprep.subr.bf16.mxu0 0
      %1675 = vmatpush1.bf16.msra.mxu0 0
      %1676 = vmatprep.subr.bf16.mxu0 0
      %1677 = vmatpush1.bf16.msra.mxu0 0
      %1678 = vmatprep.subr.bf16.mxu0 0
      %1679 = vmatpush1.bf16.msra.mxu0 0
      %1680 = vmatprep.subr.bf16.mxu0 0
      %1681 = vmatpush1.bf16.msra.mxu0 0
      %1682 = vmatprep.subr.bf16.mxu0 0
      %1683 = vmatpush1.bf16.msra.mxu0 0
      %1684 = vmatprep.subr.bf16.mxu0 0
      %1685 = vmatpush1.bf16.msra.mxu0 0
      %1686 = vmatprep.subr.bf16.mxu0 0
      %1687 = vmatpush1.bf16.msra.mxu0 0
      %1688 = vmatprep.subr.bf16.mxu0 0
      %1689 = vmatpush1.bf16.msra.mxu0 0
      %1690 = vmatprep.subr.bf16.mxu0 0
      %1691 = vmatpush1.bf16.msra.mxu0 0
      %1692 = vmatprep.subr.bf16.mxu0 0
      %1693 = vmatpush1.bf16.msra.mxu0 0
      %1694 = vmatprep.mubr.bf16.mxu0 0
      %1695 = vmatmul.mubr.bf16.gmra.mrb[0].mxu0 %v1639
      %v1696 = vpop.f32.mrb[0].mxu0
      %v1697 = vadd.f32 %v1624, %v1696
      %v1698 = vpop.f32.mrb[0].mxu0
      %v1699 = vpop.f32.mrb[0].mxu0
      %v1700 = vadd.f32 %v1624, %v1699
      %v1701 = vpop.f32.mrb[0].mxu0
      %1702 = vmatprep.mubr.bf16.mxu0 0
      %1703 = vmatmul.mubr.bf16.gmra.mrb[0].mxu0 %v1642
      %v1704 = vpop.f32.mrb[0].mxu0
      %v1705 = vadd.f32 %v1624, %v1704
      %v1706 = vpop.f32.mrb[0].mxu0
      %v1707 = vpop.f32.mrb[0].mxu0
      %v1708 = vadd.f32 %v1624, %v1707
      %v1709 = vpop.f32.mrb[0].mxu0
      %1710 = vmatprep.mubr.bf16.mxu0 0
      %1711 = vmatmul.mubr.bf16.gmra.mrb[0].mxu0 %v1645
      %v1712 = vpop.f32.mrb[0].mxu0
      %v1713 = vadd.f32 %v1624, %v1712
      %v1714 = vpop.f32.mrb[0].mxu0
      %v1715 = vpop.f32.mrb[0].mxu0
      %v1716 = vadd.f32 %v1624, %v1715
      %v1717 = vpop.f32.mrb[0].mxu0
      %1718 = vmatprep.mubr.bf16.mxu0 0
      %1719 = vmatmul.mubr.bf16.gmra.mrb[0].mxu0 %v1648
      %v1720 = vpop.f32.mrb[0].mxu0
      %v1721 = vadd.f32 %v1624, %v1720
      %v1722 = vpop.f32.mrb[0].mxu0
      %v1723 = vpop.f32.mrb[0].mxu0
      %v1724 = vadd.f32 %v1624, %v1723
      %v1725 = vpop.f32.mrb[0].mxu0
      %1726 = vmatprep.mubr.bf16.mxu0 0
      %1727 = vmatmul.mubr.bf16.gmra.mrb[0].mxu0 %v1651
      %v1728 = vpop.f32.mrb[0].mxu0
      %v1729 = vadd.f32 %v1624, %v1728
      %v1730 = vpop.f32.mrb[0].mxu0
      %v1731 = vpop.f32.mrb[0].mxu0
      %v1732 = vadd.f32 %v1624, %v1731
      %v1733 = vpop.f32.mrb[0].mxu0
      %1734 = vmatprep.mubr.bf16.mxu0 0
      %1735 = vmatmul.mubr.bf16.gmra.mrb[0].mxu0 %v1654
      %v1736 = vpop.f32.mrb[0].mxu0
      %v1737 = vadd.f32 %v1624, %v1736
      %v1738 = vpop.f32.mrb[0].mxu0
      %v1739 = vpop.f32.mrb[0].mxu0
      %v1740 = vadd.f32 %v1624, %v1739
      %v1741 = vpop.f32.mrb[0].mxu0
      %1742 = vmatprep.mubr.bf16.mxu0 0
      %1743 = vmatmul.mubr.bf16.gmra.mrb[0].mxu0 %v1657
      %v1744 = vpop.f32.mrb[0].mxu0
      %v1745 = vadd.f32 %v1624, %v1744
      %v1746 = vpop.f32.mrb[0].mxu0
      %v1747 = vpop.f32.mrb[0].mxu0
      %v1748 = vadd.f32 %v1624, %v1747
      %v1749 = vpop.f32.mrb[0].mxu0
      %1750 = vmatprep.mubr.bf16.mxu0 0
      %1751 = vmatmul.mubr.bf16.gmra.mrb[0].mxu0 %v1660
      %v1752 = vpop.f32.mrb[0].mxu0
      %v1753 = vadd.f32 %v1624, %v1752
      %v1754 = vpop.f32.mrb[0].mxu0
      %v1755 = vpop.f32.mrb[0].mxu0
      %v1756 = vadd.f32 %v1624, %v1755
      %v1757 = vpop.f32.mrb[0].mxu0
      %1758 = vdwg.mxu0
      %vm1759 = vcmask 130048
      %1760 = vst.msk [vmem:[%s633] sm:$0xff] %vm1759, %v1697
      %1761 = vst.msk [vmem:[%s633 + $0x8] sm:$0xff] %vm1759, %v1700
      %1762 = vst.msk [vmem:[%s633 + $0x10] sm:$0xff] %vm1759, %v1705
      %1763 = vst.msk [vmem:[%s633 + $0x18] sm:$0xff] %vm1759, %v1708
      %1764 = vst.msk [vmem:[%s633 + $0x20] sm:$0xff] %vm1759, %v1713
      %1765 = vst.msk [vmem:[%s633 + $0x28] sm:$0xff] %vm1759, %v1716
      %1766 = vst.msk [vmem:[%s633 + $0x30] sm:$0xff] %vm1759, %v1721
      %1767 = vst.msk [vmem:[%s633 + $0x38] sm:$0xff] %vm1759, %v1724
      %1768 = vst.msk [vmem:[%s633 + $0x40] sm:$0xff] %vm1759, %v1729
      %1769 = vst.msk [vmem:[%s633 + $0x48] sm:$0xff] %vm1759, %v1732
      %1770 = vst.msk [vmem:[%s633 + $0x50] sm:$0xff] %vm1759, %v1737
      %1771 = vst.msk [vmem:[%s633 + $0x58] sm:$0xff] %vm1759, %v1740
      %1772 = vst.msk [vmem:[%s633 + $0x60] sm:$0xff] %vm1759, %v1745
      %1773 = vst.msk [vmem:[%s633 + $0x68] sm:$0xff] %vm1759, %v1748
      %1774 = vst.msk [vmem:[%s633 + $0x70] sm:$0xff] %vm1759, %v1753
      %1775 = vst.msk [vmem:[%s633 + $0x78] sm:$0xff] %vm1759, %v1756
      %s1776 = smul.u32 16, %s27
      %p1777 = scmp.lt.s32.totalorder %s1776, 31
      %s1778 = scalar_select %p1777, %s1776, 31
      %s1779 = smul.addr %s1778, 8
      %s1780 = scalar_lea.vmem %s16, %s1779
      // Predicated region
      $region85: #{recursive_encoder_forward.1} parent=83 // pred_check
        %p1781 = pneg %p411
      $region86: #{recursive_encoder_forward.1} parent=83 // pred_check_branch
        %1783 = sbr.rel (%p1781) target = $region88
      $region87: #{recursive_encoder_forward.1} parent=83 // pred_region
        %s1784 = smul.u32 16, %s27
      $region88: #{recursive_encoder_forward.1} parent=83 // pred_fallthru
        _
    $region84: #{recursive_encoder_forward.1} parent=5 // pred_fallthru
      _
    %p1785 = scmp.le.s32.totalorder 2, %s22
    // Predicated region
    $region89: #{recursive_encoder_forward.1} parent=5 // pred_check
      %p1786 = pneg %p1785
    $region90: #{recursive_encoder_forward.1} parent=5 // pred_check_branch
      %1788 = sbr.rel (%p1786) target = $region92
    $region91: #{recursive_encoder_forward.1} parent=5 // pred_region
      %s1789 = ssub.s32 %s22, 2
      // Predicated region
      $region93: #{recursive_encoder_forward.1} parent=91 // pred_check
        %p1790 = pneg %p417
      $region94: #{recursive_encoder_forward.1} parent=91 // pred_check_branch
        %1792 = sbr.rel (%p1790) target = $region96
      $region95: #{recursive_encoder_forward.1} parent=91 // pred_region
        %s1793 = smul.u32 16, %s28
        %p1794 = scmp.lt.s32.totalorder %s1793, 31
        %s1795 = scalar_select %p1794, %s1793, 31
        %s1796 = smul.addr %s1795, 8
        %s1797 = scalar_lea.vmem %s16, %s1796
      $region96: #{recursive_encoder_forward.1} parent=91 // pred_fallthru
        _
    $region92: #{recursive_encoder_forward.1} parent=5 // pred_fallthru
      _
  $region6: #{recursive_encoder_forward.1} parent=0 // loop_footer
    %s26 = sadd.s32 1, %s22
  $region7: #{recursive_encoder_forward.1} parent=0 // loop_footer_branch
    %21 = sbr.rel target = $region3
  $region8: #{recursive_encoder_forward.1} parent=0 // loop_exit
    _

</llo_original>
